<compile_context>
chip_gen: v7x
topology: tpu7x:2x2x1
jax: 0.10.0
libtpu: 0.0.40
codegen_flags: <defaults>
</compile_context>

<pallas_src>
import jax
import jax.numpy as jnp
from jax.experimental import pallas as pl
from jax.experimental.pallas import tpu as pltpu

IN_SIZE = 6
IN_PAD = 8       # feature rows padded to the 8-sublane granularity
LN_EPS = 1e-5
MAX_TB = 2048    # batch-tile cap (lanes); safe on v5e/v6e/v7x VMEM budgets

MEAN = jnp.array([0.43, 0.0, 0.11, 0.0, 0.0, 0.62], dtype=jnp.float32)
STD = jnp.array([0.09, 0.12, 0.05, 0.5, 0.5, 0.3], dtype=jnp.float32)


def _round_up(x, m):
    return (x + m - 1) // m * m


def _cdiv(a, b):
    return (a + b - 1) // b


def _layernorm_t(h, gamma, beta):
    """f32 LayerNorm over the feature axis (axis 0 = sublanes) in the
    E[x^2] - E[x]^2 form so the two cross-sublane reductions are independent."""
    inv_n = 1.0 / h.shape[0]
    s1 = jnp.sum(h, axis=0, keepdims=True)
    s2 = jnp.sum(h * h, axis=0, keepdims=True)
    mu = s1 * inv_n
    var = s2 * inv_n - mu * mu
    return (h - mu) * jax.lax.rsqrt(var + LN_EPS) * gamma + beta


def scope_net_kernel(
    x_ref,                       # (8, TB) f32 input tile (std folded into w1res)
    w1res_ref, b1res_ref,        # (128, 8) bf16, (128, 1) f32: [enc L(6,64); res L(6,64)]
    g1_ref, b1_ref,              # LayerNorm(64) params, f32 columns
    w2_ref, g2_ref, b2_ref,      # (128, 64) bf16 + LayerNorm(128)
    w3_ref,                      # (64, 128) bf16
    g4_ref, b4_ref,              # decoder LayerNorm(64)
    w5_ref, g5_ref, b5_ref,      # (16, 64) bf16 + LayerNorm(16)
    w6_ref, b6_ref,              # final Linear(16,1) weight column + bias, f32
    o_ref,                       # (1, TB) f32 lane-dense output tile
):
    bf16 = jnp.bfloat16
    xb = x_ref[...].astype(bf16)

    # Fused encoder-first-layer + residual matmul (bf16 MXU, f32 accumulation).
    hcat = jnp.dot(w1res_ref[...], xb, preferred_element_type=jnp.float32)
    hcat = hcat + b1res_ref[...]
    h = hcat[:64, :]             # encoder branch   (aligned sublane slice)
    r = hcat[64:, :]             # residual branch  (aligned sublane slice)

    # encoder
    h = jnp.maximum(_layernorm_t(h, g1_ref[...], b1_ref[...]), 0.0)
    h = jnp.dot(w2_ref[...], h.astype(bf16), preferred_element_type=jnp.float32)
    h = jnp.maximum(_layernorm_t(h, g2_ref[...], b2_ref[...]), 0.0)
    h = jnp.dot(w3_ref[...], h.astype(bf16), preferred_element_type=jnp.float32)
    h = h + r

    # decoder
    h = jnp.maximum(_layernorm_t(h, g4_ref[...], b4_ref[...]), 0.0)
    h = jnp.dot(w5_ref[...], h.astype(bf16), preferred_element_type=jnp.float32)
    h = jnp.maximum(_layernorm_t(h, g5_ref[...], b5_ref[...]), 0.0)

    # final 16 -> 1: VPU multiply + sublane reduce; already a lane-dense row.
    out = jnp.sum(h * w6_ref[...], axis=0, keepdims=True) + b6_ref[...]
    o_ref[...] = jax.nn.sigmoid(out)


def _pick_tiling(B):
    """TB multiple of 128, <= MAX_TB; >= 2 balanced (even) tiles once
    round_up(B,128) > 256 so both v7x TensorCores get work, while keeping
    padding waste small at large batch sizes."""
    b128 = _round_up(max(B, 1), 128)
    if b128 <= 256:
        return 1, b128
    n_tiles = max(2, _cdiv(b128, MAX_TB))
    if n_tiles % 2:
        n_tiles += 1
    tb = _round_up(_cdiv(b128, n_tiles), 128)
    return n_tiles, tb


def make_params(key):
    """Deterministic synthetic parameters in PyTorch layout: Linear weights are
    (out, in); bias only on the final Linear(16,1); LayerNorm affines randomized
    slightly so the affine path is exercised."""
    ks = jax.random.split(key, 15)

    def lin(k, fan_in, fan_out):
        bound = 1.0 / jnp.sqrt(fan_in)
        return jax.random.uniform(k, (fan_out, fan_in), jnp.float32, -bound, bound)

    def ln_affine(kg, kb, n):
        g = 1.0 + 0.1 * jax.random.normal(kg, (n,), jnp.float32)
        b = 0.1 * jax.random.normal(kb, (n,), jnp.float32)
        return g, b

    g1, b1 = ln_affine(ks[7], ks[8], 64)
    g2, b2 = ln_affine(ks[9], ks[10], 128)
    g4, b4 = ln_affine(ks[11], ks[12], 64)
    g5, b5 = ln_affine(ks[13], ks[14], 16)

    return dict(
        w1=lin(ks[0], IN_SIZE, 64),
        g1=g1, b1=b1,
        w2=lin(ks[1], 64, 128),
        g2=g2, b2=b2,
        w3=lin(ks[2], 128, 64),
        wres=lin(ks[3], IN_SIZE, 64),
        g4=g4, b4=b4,
        w5=lin(ks[4], 64, 16),
        g5=g5, b5=b5,
        w6=lin(ks[5], 16, 1),
        b6=jax.random.uniform(ks[6], (1,), jnp.float32,
                              -1.0 / jnp.sqrt(16.0), 1.0 / jnp.sqrt(16.0)),
    )


@jax.jit
def scope_net_forward(x, params):
    B = x.shape[0]
    n_tiles, TB = _pick_tiling(B)
    B_pad = n_tiles * TB

    # Feature-major (8, B_pad) input; feature rows 6..7 and batch cols >= B are zero.
    x_t = jnp.zeros((IN_PAD, B_pad), jnp.float32).at[:IN_SIZE, :B].set(x.T)

    # Fuse encoder Linear(6,64) + residual Linear(6,64) (both bias=False) and
    # fold the (x - mean) / std standardization into the weights + bias.
    w1res = jnp.concatenate([params["w1"], params["wres"]], axis=0)          # (128, 6)
    w1res_bf = (w1res / STD[None, :]).astype(jnp.bfloat16)                   # bf16 MXU operand
    b1res = (-(w1res_bf.astype(jnp.float32) @ MEAN)).reshape(128, 1)         # f32 bias
    w1res_p = jnp.zeros((128, IN_PAD), jnp.bfloat16).at[:, :IN_SIZE].set(w1res_bf)

    col = lambda v: v.reshape(-1, 1).astype(jnp.float32)
    bf = lambda w: w.astype(jnp.bfloat16)

    args = (
        x_t,
        w1res_p, b1res,
        col(params["g1"]), col(params["b1"]),
        bf(params["w2"]), col(params["g2"]), col(params["b2"]),
        bf(params["w3"]),
        col(params["g4"]), col(params["b4"]),
        bf(params["w5"]), col(params["g5"]), col(params["b5"]),
        params["w6"].reshape(16, 1).astype(jnp.float32),
        params["b6"].reshape(1, 1).astype(jnp.float32),
    )

    x_spec = pl.BlockSpec((IN_PAD, TB), lambda i: (0, i))
    resident = lambda a: pl.BlockSpec(a.shape, lambda i: (0, 0))   # stays in VMEM
    in_specs = [x_spec] + [resident(a) for a in args[1:]]

    out = pl.pallas_call(
        scope_net_kernel,
        grid=(n_tiles,),
        out_shape=jax.ShapeDtypeStruct((1, B_pad), jnp.float32),
        in_specs=in_specs,
        out_specs=pl.BlockSpec((1, TB), lambda i: (0, i)),
        compiler_params=pltpu.CompilerParams(
            dimension_semantics=("parallel",),
            vmem_limit_bytes=32 * 1024 * 1024),
    )(*args)

    return out[0, :B].reshape(B, 1)


def reference_forward(x, params):
    """Pure-JAX f32 reference matching the PyTorch module semantics."""
    def ln(h, g, b):
        mu = jnp.mean(h, axis=-1, keepdims=True)
        var = jnp.mean((h - mu) * (h - mu), axis=-1, keepdims=True)
        return (h - mu) * jax.lax.rsqrt(var + LN_EPS) * g + b

    s = (x - MEAN) / STD
    h = s @ params["w1"].T
    h = jnp.maximum(ln(h, params["g1"], params["b1"]), 0.0)
    h = h @ params["w2"].T
    h = jnp.maximum(ln(h, params["g2"], params["b2"]), 0.0)
    h = h @ params["w3"].T
    h = h + s @ params["wres"].T
    h = jnp.maximum(ln(h, params["g4"], params["b4"]), 0.0)
    h = h @ params["w5"].T
    h = jnp.maximum(ln(h, params["g5"], params["b5"]), 0.0)
    out = h @ params["w6"].T + params["b6"]
    return jax.nn.sigmoid(out)


if __name__ == "__main__":
    key = jax.random.PRNGKey(0)
    k_x, k_p = jax.random.split(key)
    params = make_params(k_p)

    # Small batch: single 128-lane tile.
    B = 8
    x = jax.random.normal(k_x, (B, IN_SIZE), jnp.float32)
    out = jax.block_until_ready(scope_net_forward(x, params))
    ref = reference_forward(x, params)
    assert out.shape == (B, 1)
    err = float(jnp.max(jnp.abs(out - ref)))
    # bf16 MXU operands -> relaxed tolerance vs the f32 reference.
    assert err < 3e-2, f"small-batch max abs err {err}"

    # Multi-tile batch: exercises the grid, even tile count (2 x 1152),
    # resident weights, and padded trailing batch columns.
    B2 = 2050
    x2 = jax.random.normal(jax.random.PRNGKey(1), (B2, IN_SIZE), jnp.float32)
    out2 = jax.block_until_ready(scope_net_forward(x2, params))
    ref2 = reference_forward(x2, params)
    assert out2.shape == (B2, 1)
    err2 = float(jnp.max(jnp.abs(out2 - ref2)))
    assert err2 < 3e-2, f"multi-tile max abs err {err2}"

    print("KERNEL_OK")
</pallas_src>

<mosaic_0001>
module attributes {stable_mosaic.version = 11 : i64} {
  func.func @scope_net_kernel(%arg0: i32, %arg1: memref<8x128xf32, #tpu.memory_space<vmem>>, %arg2: memref<128x8xbf16, #tpu.memory_space<vmem>>, %arg3: memref<128x1xf32, #tpu.memory_space<vmem>>, %arg4: memref<64x1xf32, #tpu.memory_space<vmem>>, %arg5: memref<64x1xf32, #tpu.memory_space<vmem>>, %arg6: memref<128x64xbf16, #tpu.memory_space<vmem>>, %arg7: memref<128x1xf32, #tpu.memory_space<vmem>>, %arg8: memref<128x1xf32, #tpu.memory_space<vmem>>, %arg9: memref<64x128xbf16, #tpu.memory_space<vmem>>, %arg10: memref<64x1xf32, #tpu.memory_space<vmem>>, %arg11: memref<64x1xf32, #tpu.memory_space<vmem>>, %arg12: memref<16x64xbf16, #tpu.memory_space<vmem>>, %arg13: memref<16x1xf32, #tpu.memory_space<vmem>>, %arg14: memref<16x1xf32, #tpu.memory_space<vmem>>, %arg15: memref<16x1xf32, #tpu.memory_space<vmem>>, %arg16: memref<1x1xf32, #tpu.memory_space<vmem>>, %arg17: memref<1x128xf32, #tpu.memory_space<vmem>>) attributes {dimension_semantics = [#tpu.dimension_semantics<parallel>], iteration_bounds = array<i64: 1>, scalar_prefetch = 0 : i64, scratch_operands = 0 : i64, tpu.core_type = #tpu.core_type<tc>, window_params = [{transform_indices = @transform_0, window_bounds = array<i64: 8, 128>}, {pipeline_mode = #tpu.pipeline_mode<synchronous>, transform_indices = @transform_1, window_bounds = array<i64: 128, 8>}, {pipeline_mode = #tpu.pipeline_mode<synchronous>, transform_indices = @transform_2, window_bounds = array<i64: 128, 1>}, {pipeline_mode = #tpu.pipeline_mode<synchronous>, transform_indices = @transform_3, window_bounds = array<i64: 64, 1>}, {pipeline_mode = #tpu.pipeline_mode<synchronous>, transform_indices = @transform_4, window_bounds = array<i64: 64, 1>}, {pipeline_mode = #tpu.pipeline_mode<synchronous>, transform_indices = @transform_5, window_bounds = array<i64: 128, 64>}, {pipeline_mode = #tpu.pipeline_mode<synchronous>, transform_indices = @transform_6, window_bounds = array<i64: 128, 1>}, {pipeline_mode = #tpu.pipeline_mode<synchronous>, transform_indices = @transform_7, window_bounds = array<i64: 128, 1>}, {pipeline_mode = #tpu.pipeline_mode<synchronous>, transform_indices = @transform_8, window_bounds = array<i64: 64, 128>}, {pipeline_mode = #tpu.pipeline_mode<synchronous>, transform_indices = @transform_9, window_bounds = array<i64: 64, 1>}, {pipeline_mode = #tpu.pipeline_mode<synchronous>, transform_indices = @transform_10, window_bounds = array<i64: 64, 1>}, {pipeline_mode = #tpu.pipeline_mode<synchronous>, transform_indices = @transform_11, window_bounds = array<i64: 16, 64>}, {pipeline_mode = #tpu.pipeline_mode<synchronous>, transform_indices = @transform_12, window_bounds = array<i64: 16, 1>}, {pipeline_mode = #tpu.pipeline_mode<synchronous>, transform_indices = @transform_13, window_bounds = array<i64: 16, 1>}, {pipeline_mode = #tpu.pipeline_mode<synchronous>, transform_indices = @transform_14, window_bounds = array<i64: 16, 1>}, {pipeline_mode = #tpu.pipeline_mode<synchronous>, transform_indices = @transform_15, window_bounds = array<i64: 1, 1>}, {transform_indices = @transform_16, window_bounds = array<i64: 1, 128>}]} {
    %c0 = arith.constant 0 : index
    %c0_0 = arith.constant 0 : index
    %0 = vector.load %arg1[%c0, %c0_0] : memref<8x128xf32, #tpu.memory_space<vmem>>, vector<8x128xf32>
    %1 = arith.truncf %0 : vector<8x128xf32> to vector<8x128xbf16>
    %c0_1 = arith.constant 0 : index
    %c0_2 = arith.constant 0 : index
    %2 = vector.load %arg2[%c0_1, %c0_2] : memref<128x8xbf16, #tpu.memory_space<vmem>>, vector<128x8xbf16>
    %cst = arith.constant dense<0.000000e+00> : vector<128x128xf32>
    %3 = tpu.matmul %2, %1, %cst {dimension_numbers = #tpu.dot_dimension_numbers<[1], [0], [0], [1], [0, 0, 1, 1], [], []>} : vector<128x8xbf16>, vector<8x128xbf16>, vector<128x128xf32> -> vector<128x128xf32>
    %c0_3 = arith.constant 0 : index
    %c0_4 = arith.constant 0 : index
    %4 = vector.load %arg3[%c0_3, %c0_4] : memref<128x1xf32, #tpu.memory_space<vmem>>, vector<128x1xf32>
    %5 = vector.broadcast %4 : vector<128x1xf32> to vector<128x128xf32>
    %6 = arith.addf %3, %5 : vector<128x128xf32>
    %7 = vector.extract_strided_slice %6 {offsets = [0, 0], sizes = [64, 128], strides = [1, 1]} : vector<128x128xf32> to vector<64x128xf32>
    %8 = vector.extract_strided_slice %6 {offsets = [64, 0], sizes = [64, 128], strides = [1, 1]} : vector<128x128xf32> to vector<64x128xf32>
    %c0_5 = arith.constant 0 : index
    %c0_6 = arith.constant 0 : index
    %9 = vector.load %arg4[%c0_5, %c0_6] : memref<64x1xf32, #tpu.memory_space<vmem>>, vector<64x1xf32>
    %c0_7 = arith.constant 0 : index
    %c0_8 = arith.constant 0 : index
    %10 = vector.load %arg5[%c0_7, %c0_8] : memref<64x1xf32, #tpu.memory_space<vmem>>, vector<64x1xf32>
    %cst_9 = arith.constant dense<0.000000e+00> : vector<128xf32>
    %11 = vector.multi_reduction <add>, %7, %cst_9 [0] : vector<64x128xf32> to vector<128xf32>
    %12 = vector.shape_cast %11 : vector<128xf32> to vector<1x128xf32>
    %13 = arith.mulf %7, %7 : vector<64x128xf32>
    %cst_10 = arith.constant dense<0.000000e+00> : vector<128xf32>
    %14 = vector.multi_reduction <add>, %13, %cst_10 [0] : vector<64x128xf32> to vector<128xf32>
    %15 = vector.shape_cast %14 : vector<128xf32> to vector<1x128xf32>
    %cst_11 = arith.constant 1.562500e-02 : f32
    %16 = vector.broadcast %cst_11 : f32 to vector<1x128xf32>
    %17 = arith.mulf %12, %16 : vector<1x128xf32>
    %cst_12 = arith.constant 1.562500e-02 : f32
    %18 = vector.broadcast %cst_12 : f32 to vector<1x128xf32>
    %19 = arith.mulf %15, %18 : vector<1x128xf32>
    %20 = arith.mulf %17, %17 : vector<1x128xf32>
    %21 = arith.subf %19, %20 : vector<1x128xf32>
    %22 = vector.broadcast %17 : vector<1x128xf32> to vector<64x128xf32>
    %23 = arith.subf %7, %22 : vector<64x128xf32>
    %cst_13 = arith.constant 9.99999974E-6 : f32
    %24 = vector.broadcast %cst_13 : f32 to vector<1x128xf32>
    %25 = arith.addf %21, %24 : vector<1x128xf32>
    %26 = math.rsqrt %25 : vector<1x128xf32>
    %27 = vector.broadcast %26 : vector<1x128xf32> to vector<64x128xf32>
    %28 = arith.mulf %23, %27 : vector<64x128xf32>
    %29 = vector.broadcast %9 : vector<64x1xf32> to vector<64x128xf32>
    %30 = arith.mulf %28, %29 : vector<64x128xf32>
    %31 = vector.broadcast %10 : vector<64x1xf32> to vector<64x128xf32>
    %32 = arith.addf %30, %31 : vector<64x128xf32>
    %cst_14 = arith.constant 0.000000e+00 : f32
    %33 = vector.broadcast %cst_14 : f32 to vector<64x128xf32>
    %34 = arith.maximumf %32, %33 : vector<64x128xf32>
    %c0_15 = arith.constant 0 : index
    %c0_16 = arith.constant 0 : index
    %35 = vector.load %arg6[%c0_15, %c0_16] : memref<128x64xbf16, #tpu.memory_space<vmem>>, vector<128x64xbf16>
    %36 = arith.truncf %34 : vector<64x128xf32> to vector<64x128xbf16>
    %cst_17 = arith.constant dense<0.000000e+00> : vector<128x128xf32>
    %37 = tpu.matmul %35, %36, %cst_17 {dimension_numbers = #tpu.dot_dimension_numbers<[1], [0], [0], [1], [0, 0, 1, 1], [], []>} : vector<128x64xbf16>, vector<64x128xbf16>, vector<128x128xf32> -> vector<128x128xf32>
    %c0_18 = arith.constant 0 : index
    %c0_19 = arith.constant 0 : index
    %38 = vector.load %arg7[%c0_18, %c0_19] : memref<128x1xf32, #tpu.memory_space<vmem>>, vector<128x1xf32>
    %c0_20 = arith.constant 0 : index
    %c0_21 = arith.constant 0 : index
    %39 = vector.load %arg8[%c0_20, %c0_21] : memref<128x1xf32, #tpu.memory_space<vmem>>, vector<128x1xf32>
    %cst_22 = arith.constant dense<0.000000e+00> : vector<128xf32>
    %40 = vector.multi_reduction <add>, %37, %cst_22 [0] : vector<128x128xf32> to vector<128xf32>
    %41 = vector.shape_cast %40 : vector<128xf32> to vector<1x128xf32>
    %42 = arith.mulf %37, %37 : vector<128x128xf32>
    %cst_23 = arith.constant dense<0.000000e+00> : vector<128xf32>
    %43 = vector.multi_reduction <add>, %42, %cst_23 [0] : vector<128x128xf32> to vector<128xf32>
    %44 = vector.shape_cast %43 : vector<128xf32> to vector<1x128xf32>
    %cst_24 = arith.constant 7.812500e-03 : f32
    %45 = vector.broadcast %cst_24 : f32 to vector<1x128xf32>
    %46 = arith.mulf %41, %45 : vector<1x128xf32>
    %cst_25 = arith.constant 7.812500e-03 : f32
    %47 = vector.broadcast %cst_25 : f32 to vector<1x128xf32>
    %48 = arith.mulf %44, %47 : vector<1x128xf32>
    %49 = arith.mulf %46, %46 : vector<1x128xf32>
    %50 = arith.subf %48, %49 : vector<1x128xf32>
    %51 = vector.broadcast %46 : vector<1x128xf32> to vector<128x128xf32>
    %52 = arith.subf %37, %51 : vector<128x128xf32>
    %cst_26 = arith.constant 9.99999974E-6 : f32
    %53 = vector.broadcast %cst_26 : f32 to vector<1x128xf32>
    %54 = arith.addf %50, %53 : vector<1x128xf32>
    %55 = math.rsqrt %54 : vector<1x128xf32>
    %56 = vector.broadcast %55 : vector<1x128xf32> to vector<128x128xf32>
    %57 = arith.mulf %52, %56 : vector<128x128xf32>
    %58 = vector.broadcast %38 : vector<128x1xf32> to vector<128x128xf32>
    %59 = arith.mulf %57, %58 : vector<128x128xf32>
    %60 = vector.broadcast %39 : vector<128x1xf32> to vector<128x128xf32>
    %61 = arith.addf %59, %60 : vector<128x128xf32>
    %cst_27 = arith.constant 0.000000e+00 : f32
    %62 = vector.broadcast %cst_27 : f32 to vector<128x128xf32>
    %63 = arith.maximumf %61, %62 : vector<128x128xf32>
    %c0_28 = arith.constant 0 : index
    %c0_29 = arith.constant 0 : index
    %64 = vector.load %arg9[%c0_28, %c0_29] : memref<64x128xbf16, #tpu.memory_space<vmem>>, vector<64x128xbf16>
    %65 = arith.truncf %63 : vector<128x128xf32> to vector<128x128xbf16>
    %cst_30 = arith.constant dense<0.000000e+00> : vector<64x128xf32>
    %66 = tpu.matmul %64, %65, %cst_30 {dimension_numbers = #tpu.dot_dimension_numbers<[1], [0], [0], [1], [0, 0, 1, 1], [], []>} : vector<64x128xbf16>, vector<128x128xbf16>, vector<64x128xf32> -> vector<64x128xf32>
    %67 = arith.addf %66, %8 : vector<64x128xf32>
    %c0_31 = arith.constant 0 : index
    %c0_32 = arith.constant 0 : index
    %68 = vector.load %arg10[%c0_31, %c0_32] : memref<64x1xf32, #tpu.memory_space<vmem>>, vector<64x1xf32>
    %c0_33 = arith.constant 0 : index
    %c0_34 = arith.constant 0 : index
    %69 = vector.load %arg11[%c0_33, %c0_34] : memref<64x1xf32, #tpu.memory_space<vmem>>, vector<64x1xf32>
    %cst_35 = arith.constant dense<0.000000e+00> : vector<128xf32>
    %70 = vector.multi_reduction <add>, %67, %cst_35 [0] : vector<64x128xf32> to vector<128xf32>
    %71 = vector.shape_cast %70 : vector<128xf32> to vector<1x128xf32>
    %72 = arith.mulf %67, %67 : vector<64x128xf32>
    %cst_36 = arith.constant dense<0.000000e+00> : vector<128xf32>
    %73 = vector.multi_reduction <add>, %72, %cst_36 [0] : vector<64x128xf32> to vector<128xf32>
    %74 = vector.shape_cast %73 : vector<128xf32> to vector<1x128xf32>
    %cst_37 = arith.constant 1.562500e-02 : f32
    %75 = vector.broadcast %cst_37 : f32 to vector<1x128xf32>
    %76 = arith.mulf %71, %75 : vector<1x128xf32>
    %cst_38 = arith.constant 1.562500e-02 : f32
    %77 = vector.broadcast %cst_38 : f32 to vector<1x128xf32>
    %78 = arith.mulf %74, %77 : vector<1x128xf32>
    %79 = arith.mulf %76, %76 : vector<1x128xf32>
    %80 = arith.subf %78, %79 : vector<1x128xf32>
    %81 = vector.broadcast %76 : vector<1x128xf32> to vector<64x128xf32>
    %82 = arith.subf %67, %81 : vector<64x128xf32>
    %cst_39 = arith.constant 9.99999974E-6 : f32
    %83 = vector.broadcast %cst_39 : f32 to vector<1x128xf32>
    %84 = arith.addf %80, %83 : vector<1x128xf32>
    %85 = math.rsqrt %84 : vector<1x128xf32>
    %86 = vector.broadcast %85 : vector<1x128xf32> to vector<64x128xf32>
    %87 = arith.mulf %82, %86 : vector<64x128xf32>
    %88 = vector.broadcast %68 : vector<64x1xf32> to vector<64x128xf32>
    %89 = arith.mulf %87, %88 : vector<64x128xf32>
    %90 = vector.broadcast %69 : vector<64x1xf32> to vector<64x128xf32>
    %91 = arith.addf %89, %90 : vector<64x128xf32>
    %cst_40 = arith.constant 0.000000e+00 : f32
    %92 = vector.broadcast %cst_40 : f32 to vector<64x128xf32>
    %93 = arith.maximumf %91, %92 : vector<64x128xf32>
    %c0_41 = arith.constant 0 : index
    %c0_42 = arith.constant 0 : index
    %94 = vector.load %arg12[%c0_41, %c0_42] : memref<16x64xbf16, #tpu.memory_space<vmem>>, vector<16x64xbf16>
    %95 = arith.truncf %93 : vector<64x128xf32> to vector<64x128xbf16>
    %cst_43 = arith.constant dense<0.000000e+00> : vector<16x128xf32>
    %96 = tpu.matmul %94, %95, %cst_43 {dimension_numbers = #tpu.dot_dimension_numbers<[1], [0], [0], [1], [0, 0, 1, 1], [], []>} : vector<16x64xbf16>, vector<64x128xbf16>, vector<16x128xf32> -> vector<16x128xf32>
    %c0_44 = arith.constant 0 : index
    %c0_45 = arith.constant 0 : index
    %97 = vector.load %arg13[%c0_44, %c0_45] : memref<16x1xf32, #tpu.memory_space<vmem>>, vector<16x1xf32>
    %c0_46 = arith.constant 0 : index
    %c0_47 = arith.constant 0 : index
    %98 = vector.load %arg14[%c0_46, %c0_47] : memref<16x1xf32, #tpu.memory_space<vmem>>, vector<16x1xf32>
    %cst_48 = arith.constant dense<0.000000e+00> : vector<128xf32>
    %99 = vector.multi_reduction <add>, %96, %cst_48 [0] : vector<16x128xf32> to vector<128xf32>
    %100 = vector.shape_cast %99 : vector<128xf32> to vector<1x128xf32>
    %101 = arith.mulf %96, %96 : vector<16x128xf32>
    %cst_49 = arith.constant dense<0.000000e+00> : vector<128xf32>
    %102 = vector.multi_reduction <add>, %101, %cst_49 [0] : vector<16x128xf32> to vector<128xf32>
    %103 = vector.shape_cast %102 : vector<128xf32> to vector<1x128xf32>
    %cst_50 = arith.constant 6.250000e-02 : f32
    %104 = vector.broadcast %cst_50 : f32 to vector<1x128xf32>
    %105 = arith.mulf %100, %104 : vector<1x128xf32>
    %cst_51 = arith.constant 6.250000e-02 : f32
    %106 = vector.broadcast %cst_51 : f32 to vector<1x128xf32>
    %107 = arith.mulf %103, %106 : vector<1x128xf32>
    %108 = arith.mulf %105, %105 : vector<1x128xf32>
    %109 = arith.subf %107, %108 : vector<1x128xf32>
    %110 = vector.broadcast %105 : vector<1x128xf32> to vector<16x128xf32>
    %111 = arith.subf %96, %110 : vector<16x128xf32>
    %cst_52 = arith.constant 9.99999974E-6 : f32
    %112 = vector.broadcast %cst_52 : f32 to vector<1x128xf32>
    %113 = arith.addf %109, %112 : vector<1x128xf32>
    %114 = math.rsqrt %113 : vector<1x128xf32>
    %115 = vector.broadcast %114 : vector<1x128xf32> to vector<16x128xf32>
    %116 = arith.mulf %111, %115 : vector<16x128xf32>
    %117 = vector.broadcast %97 : vector<16x1xf32> to vector<16x128xf32>
    %118 = arith.mulf %116, %117 : vector<16x128xf32>
    %119 = vector.broadcast %98 : vector<16x1xf32> to vector<16x128xf32>
    %120 = arith.addf %118, %119 : vector<16x128xf32>
    %cst_53 = arith.constant 0.000000e+00 : f32
    %121 = vector.broadcast %cst_53 : f32 to vector<16x128xf32>
    %122 = arith.maximumf %120, %121 : vector<16x128xf32>
    %c0_54 = arith.constant 0 : index
    %c0_55 = arith.constant 0 : index
    %123 = vector.load %arg15[%c0_54, %c0_55] : memref<16x1xf32, #tpu.memory_space<vmem>>, vector<16x1xf32>
    %124 = vector.broadcast %123 : vector<16x1xf32> to vector<16x128xf32>
    %125 = arith.mulf %122, %124 : vector<16x128xf32>
    %cst_56 = arith.constant dense<0.000000e+00> : vector<128xf32>
    %126 = vector.multi_reduction <add>, %125, %cst_56 [0] : vector<16x128xf32> to vector<128xf32>
    %127 = vector.shape_cast %126 : vector<128xf32> to vector<1x128xf32>
    %c0_57 = arith.constant 0 : index
    %c0_58 = arith.constant 0 : index
    %128 = vector.load %arg16[%c0_57, %c0_58] : memref<1x1xf32, #tpu.memory_space<vmem>>, vector<1x1xf32>
    %129 = vector.broadcast %128 : vector<1x1xf32> to vector<1x128xf32>
    %130 = arith.addf %127, %129 : vector<1x128xf32>
    %131 = arith.negf %130 : vector<1x128xf32>
    %132 = math.exp %131 : vector<1x128xf32>
    %cst_59 = arith.constant 1.000000e+00 : f32
    %133 = vector.broadcast %cst_59 : f32 to vector<1x128xf32>
    %134 = arith.addf %133, %132 : vector<1x128xf32>
    %135 = arith.divf %133, %134 : vector<1x128xf32>
    %c0_60 = arith.constant 0 : index
    %c0_61 = arith.constant 0 : index
    %136 = vector.load %arg17[%c0_60, %c0_61] : memref<1x128xf32, #tpu.memory_space<vmem>>, vector<1x128xf32>
    tpu.vector_store %arg17[%c0_60, %c0_61], %135 {strides = array<i32>} : memref<1x128xf32, #tpu.memory_space<vmem>>, vector<1x128xf32>,
    return
  }
  func.func @transform_0(%arg0: i32) -> (i32, i32) {
    %c0_i32 = arith.constant 0 : i32
    %c0_i32_0 = arith.constant 0 : i32
    return %c0_i32, %arg0 : i32, i32
  }
  func.func @transform_1(%arg0: i32) -> (i32, i32) {
    %c0_i32 = arith.constant 0 : i32
    %c0_i32_0 = arith.constant 0 : i32
    %c0_i32_1 = arith.constant 0 : i32
    return %c0_i32, %c0_i32_0 : i32, i32
  }
  func.func @transform_2(%arg0: i32) -> (i32, i32) {
    %c0_i32 = arith.constant 0 : i32
    %c0_i32_0 = arith.constant 0 : i32
    %c0_i32_1 = arith.constant 0 : i32
    return %c0_i32, %c0_i32_0 : i32, i32
  }
  func.func @transform_3(%arg0: i32) -> (i32, i32) {
    %c0_i32 = arith.constant 0 : i32
    %c0_i32_0 = arith.constant 0 : i32
    %c0_i32_1 = arith.constant 0 : i32
    return %c0_i32, %c0_i32_0 : i32, i32
  }
  func.func @transform_4(%arg0: i32) -> (i32, i32) {
    %c0_i32 = arith.constant 0 : i32
    %c0_i32_0 = arith.constant 0 : i32
    %c0_i32_1 = arith.constant 0 : i32
    return %c0_i32, %c0_i32_0 : i32, i32
  }
  func.func @transform_5(%arg0: i32) -> (i32, i32) {
    %c0_i32 = arith.constant 0 : i32
    %c0_i32_0 = arith.constant 0 : i32
    %c0_i32_1 = arith.constant 0 : i32
    return %c0_i32, %c0_i32_0 : i32, i32
  }
  func.func @transform_6(%arg0: i32) -> (i32, i32) {
    %c0_i32 = arith.constant 0 : i32
    %c0_i32_0 = arith.constant 0 : i32
    %c0_i32_1 = arith.constant 0 : i32
    return %c0_i32, %c0_i32_0 : i32, i32
  }
  func.func @transform_7(%arg0: i32) -> (i32, i32) {
    %c0_i32 = arith.constant 0 : i32
    %c0_i32_0 = arith.constant 0 : i32
    %c0_i32_1 = arith.constant 0 : i32
    return %c0_i32, %c0_i32_0 : i32, i32
  }
  func.func @transform_8(%arg0: i32) -> (i32, i32) {
    %c0_i32 = arith.constant 0 : i32
    %c0_i32_0 = arith.constant 0 : i32
    %c0_i32_1 = arith.constant 0 : i32
    return %c0_i32, %c0_i32_0 : i32, i32
  }
  func.func @transform_9(%arg0: i32) -> (i32, i32) {
    %c0_i32 = arith.constant 0 : i32
    %c0_i32_0 = arith.constant 0 : i32
    %c0_i32_1 = arith.constant 0 : i32
    return %c0_i32, %c0_i32_0 : i32, i32
  }
  func.func @transform_10(%arg0: i32) -> (i32, i32) {
    %c0_i32 = arith.constant 0 : i32
    %c0_i32_0 = arith.constant 0 : i32
    %c0_i32_1 = arith.constant 0 : i32
    return %c0_i32, %c0_i32_0 : i32, i32
  }
  func.func @transform_11(%arg0: i32) -> (i32, i32) {
    %c0_i32 = arith.constant 0 : i32
    %c0_i32_0 = arith.constant 0 : i32
    %c0_i32_1 = arith.constant 0 : i32
    return %c0_i32, %c0_i32_0 : i32, i32
  }
  func.func @transform_12(%arg0: i32) -> (i32, i32) {
    %c0_i32 = arith.constant 0 : i32
    %c0_i32_0 = arith.constant 0 : i32
    %c0_i32_1 = arith.constant 0 : i32
    return %c0_i32, %c0_i32_0 : i32, i32
  }
  func.func @transform_13(%arg0: i32) -> (i32, i32) {
    %c0_i32 = arith.constant 0 : i32
    %c0_i32_0 = arith.constant 0 : i32
    %c0_i32_1 = arith.constant 0 : i32
    return %c0_i32, %c0_i32_0 : i32, i32
  }
  func.func @transform_14(%arg0: i32) -> (i32, i32) {
    %c0_i32 = arith.constant 0 : i32
    %c0_i32_0 = arith.constant 0 : i32
    %c0_i32_1 = arith.constant 0 : i32
    return %c0_i32, %c0_i32_0 : i32, i32
  }
  func.func @transform_15(%arg0: i32) -> (i32, i32) {
    %c0_i32 = arith.constant 0 : i32
    %c0_i32_0 = arith.constant 0 : i32
    %c0_i32_1 = arith.constant 0 : i32
    return %c0_i32, %c0_i32_0 : i32, i32
  }
  func.func @transform_16(%arg0: i32) -> (i32, i32) {
    %c0_i32 = arith.constant 0 : i32
    %c0_i32_0 = arith.constant 0 : i32
    return %c0_i32, %arg0 : i32, i32
  }
}

</mosaic_0001>

<llo_original>
// kernel: scope_net_forward.1
$region0: #{scope_net_forward.1}
  #allocation0 [shape = 'u32[]', space=smem, size = 0x4, offset = 0x4, fixed_abs, tag = 'smem constant byte address 0x4 - core index']
  #allocation1 [shape = 'u32[144,128]{1,0:T(1,128)}', space=vmem, size = 0x12000, scoped, tag = 'internal scratch']
  #allocation2 [shape = 'f32[1,1]{1,0:T(1,128)S(1)}', space=vmem, size = 0x200, scoped, tag = 'scoped memory for scope_net_forward.1']
  %s0 = inlined_call_operand.vmem [shape: f32[8,128], index: 0, kind: input, shape index: {}]
  %s1 = inlined_call_operand.vmem [shape: bf16[128,8], index: 1, kind: input, shape index: {}]
  %s2 = inlined_call_operand.vmem [shape: f32[128,1], index: 2, kind: input, shape index: {}]
  %s3 = inlined_call_operand.vmem [shape: f32[64,1], index: 3, kind: input, shape index: {}]
  %s4 = inlined_call_operand.vmem [shape: f32[64,1], index: 4, kind: input, shape index: {}]
  %s5 = inlined_call_operand.vmem [shape: bf16[128,64], index: 5, kind: input, shape index: {}]
  %s6 = inlined_call_operand.vmem [shape: f32[128,1], index: 6, kind: input, shape index: {}]
  %s7 = inlined_call_operand.vmem [shape: f32[128,1], index: 7, kind: input, shape index: {}]
  %s8 = inlined_call_operand.vmem [shape: bf16[64,128], index: 8, kind: input, shape index: {}]
  %s9 = inlined_call_operand.vmem [shape: f32[64,1], index: 9, kind: input, shape index: {}]
  %s10 = inlined_call_operand.vmem [shape: f32[64,1], index: 10, kind: input, shape index: {}]
  %s11 = inlined_call_operand.vmem [shape: bf16[16,64], index: 11, kind: input, shape index: {}]
  %s12 = inlined_call_operand.vmem [shape: f32[16,1], index: 12, kind: input, shape index: {}]
  %s13 = inlined_call_operand.vmem [shape: f32[16,1], index: 13, kind: input, shape index: {}]
  %s14 = inlined_call_operand.vmem [shape: f32[16,1], index: 14, kind: input, shape index: {}]
  %s15 = inlined_call_operand.<no memory space> [shape: f32[1,1], index: 15, kind: input, shape index: {}]
  %s16 = inlined_call_operand.vmem [shape: f32[1,128], index: 16, kind: output, shape index: {}]
  %s17 = sld [smem:[#allocation0]]
  $region74: #{scope_net_forward.1} parent=0
    _
  %s19 = ssub.s32 1, %s17
  %s20 = scalar_select 0, %s19, %s17
  %v21 = vstv %s15
  %22 = vst [vmem:[#allocation2] sm:$0x1] %v21
  // Predicated region
  $region2: #{scope_net_forward.1} parent=0 // pred_check
    _
  $region3: #{scope_net_forward.1} parent=0 // pred_check_branch
    %24 = sbr.rel (0) target = $region5
  $region4: #{scope_net_forward.1} parent=0 // pred_region
    _
  $region5: #{scope_net_forward.1} parent=0 // pred_fallthru
    _
  // Predicated region
  $region6: #{scope_net_forward.1} parent=0 // pred_check
    _
  $region7: #{scope_net_forward.1} parent=0 // pred_check_branch
    %26 = sbr.rel (0) target = $region9
  $region8: #{scope_net_forward.1} parent=0 // pred_region
    _
  $region9: #{scope_net_forward.1} parent=0 // pred_fallthru
    _
  // Predicated region
  $region10: #{scope_net_forward.1} parent=0 // pred_check
    _
  $region11: #{scope_net_forward.1} parent=0 // pred_check_branch
    %28 = sbr.rel (0) target = $region13
  $region12: #{scope_net_forward.1} parent=0 // pred_region
    _
  $region13: #{scope_net_forward.1} parent=0 // pred_fallthru
    _
  // Predicated region
  $region14: #{scope_net_forward.1} parent=0 // pred_check
    _
  $region15: #{scope_net_forward.1} parent=0 // pred_check_branch
    %30 = sbr.rel (0) target = $region17
  $region16: #{scope_net_forward.1} parent=0 // pred_region
    _
  $region17: #{scope_net_forward.1} parent=0 // pred_fallthru
    _
  // Predicated region
  $region18: #{scope_net_forward.1} parent=0 // pred_check
    _
  $region19: #{scope_net_forward.1} parent=0 // pred_check_branch
    %32 = sbr.rel (0) target = $region21
  $region20: #{scope_net_forward.1} parent=0 // pred_region
    _
  $region21: #{scope_net_forward.1} parent=0 // pred_fallthru
    _
  // Predicated region
  $region22: #{scope_net_forward.1} parent=0 // pred_check
    _
  $region23: #{scope_net_forward.1} parent=0 // pred_check_branch
    %34 = sbr.rel (0) target = $region25
  $region24: #{scope_net_forward.1} parent=0 // pred_region
    _
  $region25: #{scope_net_forward.1} parent=0 // pred_fallthru
    _
  // Predicated region
  $region26: #{scope_net_forward.1} parent=0 // pred_check
    _
  $region27: #{scope_net_forward.1} parent=0 // pred_check_branch
    %36 = sbr.rel (0) target = $region29
  $region28: #{scope_net_forward.1} parent=0 // pred_region
    _
  $region29: #{scope_net_forward.1} parent=0 // pred_fallthru
    _
  // Predicated region
  $region30: #{scope_net_forward.1} parent=0 // pred_check
    _
  $region31: #{scope_net_forward.1} parent=0 // pred_check_branch
    %38 = sbr.rel (0) target = $region33
  $region32: #{scope_net_forward.1} parent=0 // pred_region
    _
  $region33: #{scope_net_forward.1} parent=0 // pred_fallthru
    _
  // Predicated region
  $region34: #{scope_net_forward.1} parent=0 // pred_check
    _
  $region35: #{scope_net_forward.1} parent=0 // pred_check_branch
    %40 = sbr.rel (0) target = $region37
  $region36: #{scope_net_forward.1} parent=0 // pred_region
    _
  $region37: #{scope_net_forward.1} parent=0 // pred_fallthru
    _
  // Predicated region
  $region38: #{scope_net_forward.1} parent=0 // pred_check
    _
  $region39: #{scope_net_forward.1} parent=0 // pred_check_branch
    %42 = sbr.rel (0) target = $region41
  $region40: #{scope_net_forward.1} parent=0 // pred_region
    _
  $region41: #{scope_net_forward.1} parent=0 // pred_fallthru
    _
  // Predicated region
  $region42: #{scope_net_forward.1} parent=0 // pred_check
    _
  $region43: #{scope_net_forward.1} parent=0 // pred_check_branch
    %44 = sbr.rel (0) target = $region45
  $region44: #{scope_net_forward.1} parent=0 // pred_region
    _
  $region45: #{scope_net_forward.1} parent=0 // pred_fallthru
    _
  // Predicated region
  $region46: #{scope_net_forward.1} parent=0 // pred_check
    _
  $region47: #{scope_net_forward.1} parent=0 // pred_check_branch
    %46 = sbr.rel (0) target = $region49
  $region48: #{scope_net_forward.1} parent=0 // pred_region
    _
  $region49: #{scope_net_forward.1} parent=0 // pred_fallthru
    _
  // Predicated region
  $region50: #{scope_net_forward.1} parent=0 // pred_check
    _
  $region51: #{scope_net_forward.1} parent=0 // pred_check_branch
    %48 = sbr.rel (0) target = $region53
  $region52: #{scope_net_forward.1} parent=0 // pred_region
    _
  $region53: #{scope_net_forward.1} parent=0 // pred_fallthru
    _
  // Predicated region
  $region54: #{scope_net_forward.1} parent=0 // pred_check
    _
  $region55: #{scope_net_forward.1} parent=0 // pred_check_branch
    %50 = sbr.rel (0) target = $region57
  $region56: #{scope_net_forward.1} parent=0 // pred_region
    _
  $region57: #{scope_net_forward.1} parent=0 // pred_fallthru
    _
  // Predicated region
  $region58: #{scope_net_forward.1} parent=0 // pred_check
    _
  $region59: #{scope_net_forward.1} parent=0 // pred_check_branch
    %52 = sbr.rel (0) target = $region61
  $region60: #{scope_net_forward.1} parent=0 // pred_region
    _
  $region61: #{scope_net_forward.1} parent=0 // pred_fallthru
    _
  // Predicated region
  $region62: #{scope_net_forward.1} parent=0 // pred_check
    _
  $region63: #{scope_net_forward.1} parent=0 // pred_check_branch
    %54 = sbr.rel (0) target = $region65
  $region64: #{scope_net_forward.1} parent=0 // pred_region
    _
  $region65: #{scope_net_forward.1} parent=0 // pred_fallthru
    _
  %v56 = vld [vmem:[%s0] sm:$0xff]
  %v57 = vpack.c.bf16 %v56, %v56
  %v58 = vld [vmem:[%s1] sm:$0xf]
  %v59 = vld [vmem:[%s1 + $0x4] sm:$0xf]
  %v60 = vld [vmem:[%s1 + $0x8] sm:$0xf]
  %v61 = vld [vmem:[%s1 + $0xc] sm:$0xf]
  %v62 = vld [vmem:[%s1 + $0x10] sm:$0xf]
  %v63 = vld [vmem:[%s1 + $0x14] sm:$0xf]
  %v64 = vld [vmem:[%s1 + $0x18] sm:$0xf]
  %v65 = vld [vmem:[%s1 + $0x1c] sm:$0xf]
  %v66 = vld [vmem:[%s1 + $0x20] sm:$0xf]
  %v67 = vld [vmem:[%s1 + $0x24] sm:$0xf]
  %v68 = vld [vmem:[%s1 + $0x28] sm:$0xf]
  %v69 = vld [vmem:[%s1 + $0x2c] sm:$0xf]
  %v70 = vld [vmem:[%s1 + $0x30] sm:$0xf]
  %v71 = vld [vmem:[%s1 + $0x34] sm:$0xf]
  %v72 = vld [vmem:[%s1 + $0x38] sm:$0xf]
  %v73 = vld [vmem:[%s1 + $0x3c] sm:$0xf]
  %v74 = vld [vmem:[%s2] sm:$0xff]
  %v75 = vld [vmem:[%s2 + $0x8] sm:$0xff]
  %v76 = vld [vmem:[%s2 + $0x10] sm:$0xff]
  %v77 = vld [vmem:[%s2 + $0x18] sm:$0xff]
  %v78 = vld [vmem:[%s2 + $0x20] sm:$0xff]
  %v79 = vld [vmem:[%s2 + $0x28] sm:$0xff]
  %v80 = vld [vmem:[%s2 + $0x30] sm:$0xff]
  %v81 = vld [vmem:[%s2 + $0x38] sm:$0xff]
  %v82 = vld [vmem:[%s2 + $0x40] sm:$0xff]
  %v83 = vld [vmem:[%s2 + $0x48] sm:$0xff]
  %v84 = vld [vmem:[%s2 + $0x50] sm:$0xff]
  %v85 = vld [vmem:[%s2 + $0x58] sm:$0xff]
  %v86 = vld [vmem:[%s2 + $0x60] sm:$0xff]
  %v87 = vld [vmem:[%s2 + $0x68] sm:$0xff]
  %v88 = vld [vmem:[%s2 + $0x70] sm:$0xff]
  %v89 = vld [vmem:[%s2 + $0x78] sm:$0xff]
  %91 = vset.pattern.permute.xlu0 0
  %92 = vperm.xlu0 %91, %v74
  %v93 = vpop.permute.xlu0 %92
  %96 = vset.pattern.permute.xlu0 0
  %97 = vperm.xlu0 %96, %v75
  %v98 = vpop.permute.xlu0 %97
  %101 = vset.pattern.permute.xlu0 0
  %102 = vperm.xlu0 %101, %v76
  %v103 = vpop.permute.xlu0 %102
  %106 = vset.pattern.permute.xlu0 0
  %107 = vperm.xlu0 %106, %v77
  %v108 = vpop.permute.xlu0 %107
  %111 = vset.pattern.permute.xlu0 0
  %112 = vperm.xlu0 %111, %v78
  %v113 = vpop.permute.xlu0 %112
  %116 = vset.pattern.permute.xlu0 0
  %117 = vperm.xlu0 %116, %v79
  %v118 = vpop.permute.xlu0 %117
  %121 = vset.pattern.permute.xlu0 0
  %122 = vperm.xlu0 %121, %v80
  %v123 = vpop.permute.xlu0 %122
  %126 = vset.pattern.permute.xlu0 0
  %127 = vperm.xlu0 %126, %v81
  %v128 = vpop.permute.xlu0 %127
  %131 = vset.pattern.permute.xlu0 0
  %132 = vperm.xlu0 %131, %v82
  %v133 = vpop.permute.xlu0 %132
  %136 = vset.pattern.permute.xlu0 0
  %137 = vperm.xlu0 %136, %v83
  %v138 = vpop.permute.xlu0 %137
  %141 = vset.pattern.permute.xlu0 0
  %142 = vperm.xlu0 %141, %v84
  %v143 = vpop.permute.xlu0 %142
  %146 = vset.pattern.permute.xlu0 0
  %147 = vperm.xlu0 %146, %v85
  %v148 = vpop.permute.xlu0 %147
  %151 = vset.pattern.permute.xlu0 0
  %152 = vperm.xlu0 %151, %v86
  %v153 = vpop.permute.xlu0 %152
  %156 = vset.pattern.permute.xlu0 0
  %157 = vperm.xlu0 %156, %v87
  %v158 = vpop.permute.xlu0 %157
  %161 = vset.pattern.permute.xlu0 0
  %162 = vperm.xlu0 %161, %v88
  %v163 = vpop.permute.xlu0 %162
  %166 = vset.pattern.permute.xlu0 0
  %167 = vperm.xlu0 %166, %v89
  %v168 = vpop.permute.xlu0 %167
  %v186 = vunpack.c.l.b16 %v58
  %v187 = vunpack.c.l.b16 %v59
  %v188 = vunpack.c.l.b16 %v60
  %v189 = vunpack.c.l.b16 %v61
  %v190 = vunpack.c.l.b16 %v62
  %v191 = vunpack.c.l.b16 %v63
  %v192 = vunpack.c.l.b16 %v64
  %v193 = vunpack.c.l.b16 %v65
  %v194 = vunpack.c.l.b16 %v66
  %v195 = vunpack.c.l.b16 %v67
  %v196 = vunpack.c.l.b16 %v68
  %v197 = vunpack.c.l.b16 %v69
  %v198 = vunpack.c.l.b16 %v70
  %v199 = vunpack.c.l.b16 %v71
  %v200 = vunpack.c.l.b16 %v72
  %v201 = vunpack.c.l.b16 %v73
  %v202 = vpack.c.b16 %v187, %v186
  %v203 = vpack.c.b16 %v189, %v188
  %v204 = vpack.c.b16 %v191, %v190
  %v205 = vpack.c.b16 %v193, %v192
  %v206 = vpack.c.b16 %v195, %v194
  %v207 = vpack.c.b16 %v197, %v196
  %v208 = vpack.c.b16 %v199, %v198
  %v209 = vpack.c.b16 %v201, %v200
  %vm210 = vcmask 64512
  %v212 = vsel %vm210, %v202, 0
  %v215 = vsel %vm210, %v203, 0
  %v218 = vsel %vm210, %v204, 0
  %v221 = vsel %vm210, %v205, 0
  %v224 = vsel %vm210, %v206, 0
  %v227 = vsel %vm210, %v207, 0
  %v230 = vsel %vm210, %v208, 0
  %v233 = vsel %vm210, %v209, 0
  %vm235 = vcmask 1043456
  %v237 = vsel %vm235, %v57, 0
  %239 = vmatprep.subr.bf16.mxu0 0
  %240 = vmatpush1.bf16.msra.mxu0 %v237
  %241 = vmatprep.subr.bf16.mxu0 0
  %242 = vmatpush1.bf16.msra.mxu0 0
  %243 = vmatprep.subr.bf16.mxu0 0
  %244 = vmatpush1.bf16.msra.mxu0 0
  %245 = vmatprep.subr.bf16.mxu0 0
  %246 = vmatpush1.bf16.msra.mxu0 0
  %247 = vmatprep.subr.bf16.mxu0 0
  %248 = vmatpush1.bf16.msra.mxu0 0
  %249 = vmatprep.subr.bf16.mxu0 0
  %250 = vmatpush1.bf16.msra.mxu0 0
  %251 = vmatprep.subr.bf16.mxu0 0
  %252 = vmatpush1.bf16.msra.mxu0 0
  %253 = vmatprep.subr.bf16.mxu0 0
  %254 = vmatpush1.bf16.msra.mxu0 0
  %255 = vmatprep.subr.bf16.mxu0 0
  %256 = vmatpush1.bf16.msra.mxu0 0
  %257 = vmatprep.subr.bf16.mxu0 0
  %258 = vmatpush1.bf16.msra.mxu0 0
  %259 = vmatprep.subr.bf16.mxu0 0
  %260 = vmatpush1.bf16.msra.mxu0 0
  %261 = vmatprep.subr.bf16.mxu0 0
  %262 = vmatpush1.bf16.msra.mxu0 0
  %263 = vmatprep.subr.bf16.mxu0 0
  %264 = vmatpush1.bf16.msra.mxu0 0
  %265 = vmatprep.subr.bf16.mxu0 0
  %266 = vmatpush1.bf16.msra.mxu0 0
  %267 = vmatprep.subr.bf16.mxu0 0
  %268 = vmatpush1.bf16.msra.mxu0 0
  %269 = vmatprep.subr.bf16.mxu0 0
  %270 = vmatpush1.bf16.msra.mxu0 0
  %271 = vmatprep.mubr.bf16.mxu0 0
  %272 = vmatmul.mubr.bf16.gmra.mrb[0].mxu0 %v212
  %v273 = vpop.f32.mrb[0].mxu0
  %v274 = vadd.f32 %v93, %v273
  %v275 = vpop.f32.mrb[0].mxu0
  %v276 = vpop.f32.mrb[0].mxu0
  %v277 = vadd.f32 %v98, %v276
  %v278 = vpop.f32.mrb[0].mxu0
  %279 = vmatprep.mubr.bf16.mxu0 0
  %280 = vmatmul.mubr.bf16.gmra.mrb[0].mxu0 %v215
  %v281 = vpop.f32.mrb[0].mxu0
  %v282 = vadd.f32 %v103, %v281
  %v283 = vpop.f32.mrb[0].mxu0
  %v284 = vpop.f32.mrb[0].mxu0
  %v285 = vadd.f32 %v108, %v284
  %v286 = vpop.f32.mrb[0].mxu0
  %287 = vmatprep.mubr.bf16.mxu0 0
  %288 = vmatmul.mubr.bf16.gmra.mrb[0].mxu0 %v218
  %v289 = vpop.f32.mrb[0].mxu0
  %v290 = vadd.f32 %v113, %v289
  %v291 = vpop.f32.mrb[0].mxu0
  %v292 = vpop.f32.mrb[0].mxu0
  %v293 = vadd.f32 %v118, %v292
  %v294 = vpop.f32.mrb[0].mxu0
  %295 = vmatprep.mubr.bf16.mxu0 0
  %296 = vmatmul.mubr.bf16.gmra.mrb[0].mxu0 %v221
  %v297 = vpop.f32.mrb[0].mxu0
  %v298 = vadd.f32 %v123, %v297
  %v299 = vpop.f32.mrb[0].mxu0
  %v300 = vpop.f32.mrb[0].mxu0
  %v301 = vadd.f32 %v128, %v300
  %v302 = vpop.f32.mrb[0].mxu0
  %303 = vmatprep.mubr.bf16.mxu0 0
  %304 = vmatmul.mubr.bf16.gmra.mrb[0].mxu0 %v224
  %v305 = vpop.f32.mrb[0].mxu0
  %v306 = vadd.f32 %v133, %v305
  %v307 = vpop.f32.mrb[0].mxu0
  %v308 = vpop.f32.mrb[0].mxu0
  %v309 = vadd.f32 %v138, %v308
  %v310 = vpop.f32.mrb[0].mxu0
  %311 = vmatprep.mubr.bf16.mxu0 0
  %312 = vmatmul.mubr.bf16.gmra.mrb[0].mxu0 %v227
  %v313 = vpop.f32.mrb[0].mxu0
  %v314 = vadd.f32 %v143, %v313
  %v315 = vpop.f32.mrb[0].mxu0
  %v316 = vpop.f32.mrb[0].mxu0
  %v317 = vadd.f32 %v148, %v316
  %v318 = vpop.f32.mrb[0].mxu0
  %319 = vmatprep.mubr.bf16.mxu0 0
  %320 = vmatmul.mubr.bf16.gmra.mrb[0].mxu0 %v230
  %v321 = vpop.f32.mrb[0].mxu0
  %v322 = vadd.f32 %v153, %v321
  %v323 = vpop.f32.mrb[0].mxu0
  %v324 = vpop.f32.mrb[0].mxu0
  %v325 = vadd.f32 %v158, %v324
  %v326 = vpop.f32.mrb[0].mxu0
  %327 = vmatprep.mubr.bf16.mxu0 0
  %328 = vmatmul.mubr.bf16.gmra.mrb[0].mxu0 %v233
  %v329 = vpop.f32.mrb[0].mxu0
  %v330 = vadd.f32 %v163, %v329
  %v331 = vpop.f32.mrb[0].mxu0
  %v332 = vpop.f32.mrb[0].mxu0
  %v333 = vadd.f32 %v168, %v332
  %v334 = vpop.f32.mrb[0].mxu0
  %335 = vdwg.mxu0
  %v336 = vld [vmem:[%s3] sm:$0xff]
  %v337 = vld [vmem:[%s3 + $0x8] sm:$0xff]
  %v338 = vld [vmem:[%s3 + $0x10] sm:$0xff]
  %v339 = vld [vmem:[%s3 + $0x18] sm:$0xff]
  %v340 = vld [vmem:[%s3 + $0x20] sm:$0xff]
  %v341 = vld [vmem:[%s3 + $0x28] sm:$0xff]
  %v342 = vld [vmem:[%s3 + $0x30] sm:$0xff]
  %v343 = vld [vmem:[%s3 + $0x38] sm:$0xff]
  %v344 = vld [vmem:[%s4] sm:$0xff]
  %v345 = vld [vmem:[%s4 + $0x8] sm:$0xff]
  %v346 = vld [vmem:[%s4 + $0x10] sm:$0xff]
  %v347 = vld [vmem:[%s4 + $0x18] sm:$0xff]
  %v348 = vld [vmem:[%s4 + $0x20] sm:$0xff]
  %v349 = vld [vmem:[%s4 + $0x28] sm:$0xff]
  %v350 = vld [vmem:[%s4 + $0x30] sm:$0xff]
  %v351 = vld [vmem:[%s4 + $0x38] sm:$0xff]
  %v352 = vadd.f32 %v274, %v277
  %v353 = vadd.f32 %v352, %v282
  %v354 = vadd.f32 %v353, %v285
  %v355 = vadd.f32 %v354, %v290
  %v356 = vadd.f32 %v355, %v293
  %v357 = vadd.f32 %v356, %v298
  %v358 = vadd.f32 %v357, %v301
  %v359 = vrot.slane %v358, 4
  %v360 = vadd.f32 %v358, %v359
  %v361 = vrot.slane %v360, 2
  %v362 = vadd.f32 %v360, %v361
  %v363 = vrot.slane %v362, 1
  %v364 = vadd.f32 %v362, %v363
  %v365 = vmul.f32 %v274, %v274
  %v366 = vmul.f32 %v277, %v277
  %v367 = vmul.f32 %v282, %v282
  %v368 = vmul.f32 %v285, %v285
  %v369 = vmul.f32 %v290, %v290
  %v370 = vmul.f32 %v293, %v293
  %v371 = vmul.f32 %v298, %v298
  %v372 = vmul.f32 %v301, %v301
  %v373 = vadd.f32 %v365, %v366
  %v374 = vadd.f32 %v373, %v367
  %v375 = vadd.f32 %v374, %v368
  %v376 = vadd.f32 %v375, %v369
  %v377 = vadd.f32 %v376, %v370
  %v378 = vadd.f32 %v377, %v371
  %v379 = vadd.f32 %v378, %v372
  %v380 = vrot.slane %v379, 4
  %v381 = vadd.f32 %v379, %v380
  %v382 = vrot.slane %v381, 2
  %v383 = vadd.f32 %v381, %v382
  %v384 = vrot.slane %v383, 1
  %v385 = vadd.f32 %v383, %v384
  %v386 = vmul.f32 %v364, 0.015625
  %v387 = vmul.f32 %v385, 0.015625
  %v388 = vmul.f32 %v386, %v386
  %v389 = vsub.f32 %v387, %v388
  %v390 = vsub.f32 %v274, %v386
  %v391 = vsub.f32 %v277, %v386
  %v392 = vsub.f32 %v282, %v386
  %v393 = vsub.f32 %v285, %v386
  %v394 = vsub.f32 %v290, %v386
  %v395 = vsub.f32 %v293, %v386
  %v396 = vsub.f32 %v298, %v386
  %v397 = vsub.f32 %v301, %v386
  %v398 = vadd.f32 %v389, 1e-05
  %v399 = vrsqrt.pop %v398
  %v400 = vmul.f32 %v390, %v399
  %v401 = vmul.f32 %v391, %v399
  %v402 = vmul.f32 %v392, %v399
  %v403 = vmul.f32 %v393, %v399
  %v404 = vmul.f32 %v394, %v399
  %v405 = vmul.f32 %v395, %v399
  %v406 = vmul.f32 %v396, %v399
  %v407 = vmul.f32 %v397, %v399
  %409 = vset.pattern.permute.xlu0 0
  %410 = vperm.xlu0 %409, %v336
  %v411 = vpop.permute.xlu0 %410
  %414 = vset.pattern.permute.xlu0 0
  %415 = vperm.xlu0 %414, %v337
  %v416 = vpop.permute.xlu0 %415
  %419 = vset.pattern.permute.xlu0 0
  %420 = vperm.xlu0 %419, %v338
  %v421 = vpop.permute.xlu0 %420
  %424 = vset.pattern.permute.xlu0 0
  %425 = vperm.xlu0 %424, %v339
  %v426 = vpop.permute.xlu0 %425
  %429 = vset.pattern.permute.xlu0 0
  %430 = vperm.xlu0 %429, %v340
  %v431 = vpop.permute.xlu0 %430
  %434 = vset.pattern.permute.xlu0 0
  %435 = vperm.xlu0 %434, %v341
  %v436 = vpop.permute.xlu0 %435
  %439 = vset.pattern.permute.xlu0 0
  %440 = vperm.xlu0 %439, %v342
  %v441 = vpop.permute.xlu0 %440
  %444 = vset.pattern.permute.xlu0 0
  %445 = vperm.xlu0 %444, %v343
  %v446 = vpop.permute.xlu0 %445
  %v448 = vmul.f32 %v400, %v411
  %v449 = vmul.f32 %v401, %v416
  %v450 = vmul.f32 %v402, %v421
  %v451 = vmul.f32 %v403, %v426
  %v452 = vmul.f32 %v404, %v431
  %v453 = vmul.f32 %v405, %v436
  %v454 = vmul.f32 %v406, %v441
  %v455 = vmul.f32 %v407, %v446
  %457 = vset.pattern.permute.xlu0 0
  %458 = vperm.xlu0 %457, %v344
  %v459 = vpop.permute.xlu0 %458
  %462 = vset.pattern.permute.xlu0 0
  %463 = vperm.xlu0 %462, %v345
  %v464 = vpop.permute.xlu0 %463
  %467 = vset.pattern.permute.xlu0 0
  %468 = vperm.xlu0 %467, %v346
  %v469 = vpop.permute.xlu0 %468
  %472 = vset.pattern.permute.xlu0 0
  %473 = vperm.xlu0 %472, %v347
  %v474 = vpop.permute.xlu0 %473
  %477 = vset.pattern.permute.xlu0 0
  %478 = vperm.xlu0 %477, %v348
  %v479 = vpop.permute.xlu0 %478
  %482 = vset.pattern.permute.xlu0 0
  %483 = vperm.xlu0 %482, %v349
  %v484 = vpop.permute.xlu0 %483
  %487 = vset.pattern.permute.xlu0 0
  %488 = vperm.xlu0 %487, %v350
  %v489 = vpop.permute.xlu0 %488
  %492 = vset.pattern.permute.xlu0 0
  %493 = vperm.xlu0 %492, %v351
  %v494 = vpop.permute.xlu0 %493
  %v496 = vadd.f32 %v448, %v459
  %v497 = vadd.f32 %v449, %v464
  %v498 = vadd.f32 %v450, %v469
  %v499 = vadd.f32 %v451, %v474
  %v500 = vadd.f32 %v452, %v479
  %v501 = vadd.f32 %v453, %v484
  %v502 = vadd.f32 %v454, %v489
  %v503 = vadd.f32 %v455, %v494
  %v504 = vmax.f32 %v496, 0.0
  %v505 = vmax.f32 %v497, 0.0
  %v506 = vmax.f32 %v498, 0.0
  %v507 = vmax.f32 %v499, 0.0
  %v508 = vmax.f32 %v500, 0.0
  %v509 = vmax.f32 %v501, 0.0
  %v510 = vmax.f32 %v502, 0.0
  %v511 = vmax.f32 %v503, 0.0
  %v512 = vld [vmem:[%s5] sm:$0xf]
  %v513 = vld [vmem:[%s5 + $0x4] sm:$0xf]
  %v514 = vld [vmem:[%s5 + $0x8] sm:$0xf]
  %v515 = vld [vmem:[%s5 + $0xc] sm:$0xf]
  %v516 = vld [vmem:[%s5 + $0x10] sm:$0xf]
  %v517 = vld [vmem:[%s5 + $0x14] sm:$0xf]
  %v518 = vld [vmem:[%s5 + $0x18] sm:$0xf]
  %v519 = vld [vmem:[%s5 + $0x1c] sm:$0xf]
  %v520 = vld [vmem:[%s5 + $0x20] sm:$0xf]
  %v521 = vld [vmem:[%s5 + $0x24] sm:$0xf]
  %v522 = vld [vmem:[%s5 + $0x28] sm:$0xf]
  %v523 = vld [vmem:[%s5 + $0x2c] sm:$0xf]
  %v524 = vld [vmem:[%s5 + $0x30] sm:$0xf]
  %v525 = vld [vmem:[%s5 + $0x34] sm:$0xf]
  %v526 = vld [vmem:[%s5 + $0x38] sm:$0xf]
  %v527 = vld [vmem:[%s5 + $0x3c] sm:$0xf]
  %v528 = vpack.c.bf16 %v505, %v504
  %v529 = vpack.c.bf16 %v507, %v506
  %v530 = vpack.c.bf16 %v509, %v508
  %v531 = vpack.c.bf16 %v511, %v510
  %v548 = vunpack.c.l.b16 %v512
  %v549 = vunpack.c.l.b16 %v513
  %v550 = vunpack.c.l.b16 %v514
  %v551 = vunpack.c.l.b16 %v515
  %v552 = vunpack.c.l.b16 %v516
  %v553 = vunpack.c.l.b16 %v517
  %v554 = vunpack.c.l.b16 %v518
  %v555 = vunpack.c.l.b16 %v519
  %v556 = vunpack.c.l.b16 %v520
  %v557 = vunpack.c.l.b16 %v521
  %v558 = vunpack.c.l.b16 %v522
  %v559 = vunpack.c.l.b16 %v523
  %v560 = vunpack.c.l.b16 %v524
  %v561 = vunpack.c.l.b16 %v525
  %v562 = vunpack.c.l.b16 %v526
  %v563 = vunpack.c.l.b16 %v527
  %v564 = vpack.c.b16 %v549, %v548
  %v565 = vpack.c.b16 %v551, %v550
  %v566 = vpack.c.b16 %v553, %v552
  %v567 = vpack.c.b16 %v555, %v554
  %v568 = vpack.c.b16 %v557, %v556
  %v569 = vpack.c.b16 %v559, %v558
  %v570 = vpack.c.b16 %v561, %v560
  %v571 = vpack.c.b16 %v563, %v562
  %vm572 = vcmask 523264
  %v574 = vsel %vm572, %v564, 0
  %v577 = vsel %vm572, %v565, 0
  %v580 = vsel %vm572, %v566, 0
  %v583 = vsel %vm572, %v567, 0
  %v586 = vsel %vm572, %v568, 0
  %v589 = vsel %vm572, %v569, 0
  %v592 = vsel %vm572, %v570, 0
  %v595 = vsel %vm572, %v571, 0
  %597 = vmatprep.subr.bf16.mxu0 0
  %598 = vmatpush1.bf16.msra.mxu0 %v528
  %599 = vmatprep.subr.bf16.mxu0 0
  %600 = vmatpush1.bf16.msra.mxu0 %v529
  %601 = vmatprep.subr.bf16.mxu0 0
  %602 = vmatpush1.bf16.msra.mxu0 %v530
  %603 = vmatprep.subr.bf16.mxu0 0
  %604 = vmatpush1.bf16.msra.mxu0 %v531
  %605 = vmatprep.subr.bf16.mxu0 0
  %606 = vmatpush1.bf16.msra.mxu0 0
  %607 = vmatprep.subr.bf16.mxu0 0
  %608 = vmatpush1.bf16.msra.mxu0 0
  %609 = vmatprep.subr.bf16.mxu0 0
  %610 = vmatpush1.bf16.msra.mxu0 0
  %611 = vmatprep.subr.bf16.mxu0 0
  %612 = vmatpush1.bf16.msra.mxu0 0
  %613 = vmatprep.subr.bf16.mxu0 0
  %614 = vmatpush1.bf16.msra.mxu0 0
  %615 = vmatprep.subr.bf16.mxu0 0
  %616 = vmatpush1.bf16.msra.mxu0 0
  %617 = vmatprep.subr.bf16.mxu0 0
  %618 = vmatpush1.bf16.msra.mxu0 0
  %619 = vmatprep.subr.bf16.mxu0 0
  %620 = vmatpush1.bf16.msra.mxu0 0
  %621 = vmatprep.subr.bf16.mxu0 0
  %622 = vmatpush1.bf16.msra.mxu0 0
  %623 = vmatprep.subr.bf16.mxu0 0
  %624 = vmatpush1.bf16.msra.mxu0 0
  %625 = vmatprep.subr.bf16.mxu0 0
  %626 = vmatpush1.bf16.msra.mxu0 0
  %627 = vmatprep.subr.bf16.mxu0 0
  %628 = vmatpush1.bf16.msra.mxu0 0
  %629 = vmatprep.mubr.bf16.mxu0 0
  %630 = vmatmul.mubr.bf16.gmra.mrb[0].mxu0 %v574
  %v631 = vpop.f32.mrb[0].mxu0
  %v632 = vadd.f32 0.0, %v631
  %v633 = vpop.f32.mrb[0].mxu0
  %v634 = vpop.f32.mrb[0].mxu0
  %v635 = vadd.f32 0.0, %v634
  %v636 = vpop.f32.mrb[0].mxu0
  %637 = vmatprep.mubr.bf16.mxu0 0
  %638 = vmatmul.mubr.bf16.gmra.mrb[0].mxu0 %v577
  %v639 = vpop.f32.mrb[0].mxu0
  %v640 = vadd.f32 0.0, %v639
  %v641 = vpop.f32.mrb[0].mxu0
  %v642 = vpop.f32.mrb[0].mxu0
  %v643 = vadd.f32 0.0, %v642
  %v644 = vpop.f32.mrb[0].mxu0
  %645 = vmatprep.mubr.bf16.mxu0 0
  %646 = vmatmul.mubr.bf16.gmra.mrb[0].mxu0 %v580
  %v647 = vpop.f32.mrb[0].mxu0
  %v648 = vadd.f32 0.0, %v647
  %v649 = vpop.f32.mrb[0].mxu0
  %v650 = vpop.f32.mrb[0].mxu0
  %v651 = vadd.f32 0.0, %v650
  %v652 = vpop.f32.mrb[0].mxu0
  %653 = vmatprep.mubr.bf16.mxu0 0
  %654 = vmatmul.mubr.bf16.gmra.mrb[0].mxu0 %v583
  %v655 = vpop.f32.mrb[0].mxu0
  %v656 = vadd.f32 0.0, %v655
  %v657 = vpop.f32.mrb[0].mxu0
  %v658 = vpop.f32.mrb[0].mxu0
  %v659 = vadd.f32 0.0, %v658
  %v660 = vpop.f32.mrb[0].mxu0
  %661 = vmatprep.mubr.bf16.mxu0 0
  %662 = vmatmul.mubr.bf16.gmra.mrb[0].mxu0 %v586
  %v663 = vpop.f32.mrb[0].mxu0
  %v664 = vadd.f32 0.0, %v663
  %v665 = vpop.f32.mrb[0].mxu0
  %v666 = vpop.f32.mrb[0].mxu0
  %v667 = vadd.f32 0.0, %v666
  %v668 = vpop.f32.mrb[0].mxu0
  %669 = vmatprep.mubr.bf16.mxu0 0
  %670 = vmatmul.mubr.bf16.gmra.mrb[0].mxu0 %v589
  %v671 = vpop.f32.mrb[0].mxu0
  %v672 = vadd.f32 0.0, %v671
  %v673 = vpop.f32.mrb[0].mxu0
  %v674 = vpop.f32.mrb[0].mxu0
  %v675 = vadd.f32 0.0, %v674
  %v676 = vpop.f32.mrb[0].mxu0
  %677 = vmatprep.mubr.bf16.mxu0 0
  %678 = vmatmul.mubr.bf16.gmra.mrb[0].mxu0 %v592
  %v679 = vpop.f32.mrb[0].mxu0
  %v680 = vadd.f32 0.0, %v679
  %v681 = vpop.f32.mrb[0].mxu0
  %v682 = vpop.f32.mrb[0].mxu0
  %v683 = vadd.f32 0.0, %v682
  %v684 = vpop.f32.mrb[0].mxu0
  %685 = vmatprep.mubr.bf16.mxu0 0
  %686 = vmatmul.mubr.bf16.gmra.mrb[0].mxu0 %v595
  %v687 = vpop.f32.mrb[0].mxu0
  %v688 = vadd.f32 0.0, %v687
  %v689 = vpop.f32.mrb[0].mxu0
  %v690 = vpop.f32.mrb[0].mxu0
  %v691 = vadd.f32 0.0, %v690
  %v692 = vpop.f32.mrb[0].mxu0
  %693 = vdwg.mxu0
  %v694 = vld [vmem:[%s6] sm:$0xff]
  %v695 = vld [vmem:[%s6 + $0x8] sm:$0xff]
  %v696 = vld [vmem:[%s6 + $0x10] sm:$0xff]
  %v697 = vld [vmem:[%s6 + $0x18] sm:$0xff]
  %v698 = vld [vmem:[%s6 + $0x20] sm:$0xff]
  %v699 = vld [vmem:[%s6 + $0x28] sm:$0xff]
  %v700 = vld [vmem:[%s6 + $0x30] sm:$0xff]
  %v701 = vld [vmem:[%s6 + $0x38] sm:$0xff]
  %v702 = vld [vmem:[%s6 + $0x40] sm:$0xff]
  %v703 = vld [vmem:[%s6 + $0x48] sm:$0xff]
  %v704 = vld [vmem:[%s6 + $0x50] sm:$0xff]
  %v705 = vld [vmem:[%s6 + $0x58] sm:$0xff]
  %v706 = vld [vmem:[%s6 + $0x60] sm:$0xff]
  %v707 = vld [vmem:[%s6 + $0x68] sm:$0xff]
  %v708 = vld [vmem:[%s6 + $0x70] sm:$0xff]
  %v709 = vld [vmem:[%s6 + $0x78] sm:$0xff]
  %v710 = vld [vmem:[%s7] sm:$0xff]
  %v711 = vld [vmem:[%s7 + $0x8] sm:$0xff]
  %v712 = vld [vmem:[%s7 + $0x10] sm:$0xff]
  %v713 = vld [vmem:[%s7 + $0x18] sm:$0xff]
  %v714 = vld [vmem:[%s7 + $0x20] sm:$0xff]
  %v715 = vld [vmem:[%s7 + $0x28] sm:$0xff]
  %v716 = vld [vmem:[%s7 + $0x30] sm:$0xff]
  %v717 = vld [vmem:[%s7 + $0x38] sm:$0xff]
  %v718 = vld [vmem:[%s7 + $0x40] sm:$0xff]
  %v719 = vld [vmem:[%s7 + $0x48] sm:$0xff]
  %v720 = vld [vmem:[%s7 + $0x50] sm:$0xff]
  %v721 = vld [vmem:[%s7 + $0x58] sm:$0xff]
  %v722 = vld [vmem:[%s7 + $0x60] sm:$0xff]
  %v723 = vld [vmem:[%s7 + $0x68] sm:$0xff]
  %v724 = vld [vmem:[%s7 + $0x70] sm:$0xff]
  %v725 = vld [vmem:[%s7 + $0x78] sm:$0xff]
  %v726 = vadd.f32 %v632, %v635
  %v727 = vadd.f32 %v726, %v640
  %v728 = vadd.f32 %v727, %v643
  %v729 = vadd.f32 %v728, %v648
  %v730 = vadd.f32 %v729, %v651
  %v731 = vadd.f32 %v730, %v656
  %v732 = vadd.f32 %v731, %v659
  %v733 = vadd.f32 %v732, %v664
  %v734 = vadd.f32 %v733, %v667
  %v735 = vadd.f32 %v734, %v672
  %v736 = vadd.f32 %v735, %v675
  %v737 = vadd.f32 %v736, %v680
  %v738 = vadd.f32 %v737, %v683
  %v739 = vadd.f32 %v738, %v688
  %v740 = vadd.f32 %v739, %v691
  %v741 = vrot.slane %v740, 4
  %v742 = vadd.f32 %v740, %v741
  %v743 = vrot.slane %v742, 2
  %v744 = vadd.f32 %v742, %v743
  %v745 = vrot.slane %v744, 1
  %v746 = vadd.f32 %v744, %v745
  %v747 = vmul.f32 %v632, %v632
  %v748 = vmul.f32 %v635, %v635
  %v749 = vmul.f32 %v640, %v640
  %v750 = vmul.f32 %v643, %v643
  %v751 = vmul.f32 %v648, %v648
  %v752 = vmul.f32 %v651, %v651
  %v753 = vmul.f32 %v656, %v656
  %v754 = vmul.f32 %v659, %v659
  %v755 = vmul.f32 %v664, %v664
  %v756 = vmul.f32 %v667, %v667
  %v757 = vmul.f32 %v672, %v672
  %v758 = vmul.f32 %v675, %v675
  %v759 = vmul.f32 %v680, %v680
  %v760 = vmul.f32 %v683, %v683
  %v761 = vmul.f32 %v688, %v688
  %v762 = vmul.f32 %v691, %v691
  %v763 = vadd.f32 %v747, %v748
  %v764 = vadd.f32 %v763, %v749
  %v765 = vadd.f32 %v764, %v750
  %v766 = vadd.f32 %v765, %v751
  %v767 = vadd.f32 %v766, %v752
  %v768 = vadd.f32 %v767, %v753
  %v769 = vadd.f32 %v768, %v754
  %v770 = vadd.f32 %v769, %v755
  %v771 = vadd.f32 %v770, %v756
  %v772 = vadd.f32 %v771, %v757
  %v773 = vadd.f32 %v772, %v758
  %v774 = vadd.f32 %v773, %v759
  %v775 = vadd.f32 %v774, %v760
  %v776 = vadd.f32 %v775, %v761
  %v777 = vadd.f32 %v776, %v762
  %v778 = vrot.slane %v777, 4
  %v779 = vadd.f32 %v777, %v778
  %v780 = vrot.slane %v779, 2
  %v781 = vadd.f32 %v779, %v780
  %v782 = vrot.slane %v781, 1
  %v783 = vadd.f32 %v781, %v782
  %v784 = vmul.f32 %v746, 0.0078125
  %v785 = vmul.f32 %v783, 0.0078125
  %v786 = vmul.f32 %v784, %v784
  %v787 = vsub.f32 %v785, %v786
  %v788 = vsub.f32 %v632, %v784
  %v789 = vsub.f32 %v635, %v784
  %v790 = vsub.f32 %v640, %v784
  %v791 = vsub.f32 %v643, %v784
  %v792 = vsub.f32 %v648, %v784
  %v793 = vsub.f32 %v651, %v784
  %v794 = vsub.f32 %v656, %v784
  %v795 = vsub.f32 %v659, %v784
  %v796 = vsub.f32 %v664, %v784
  %v797 = vsub.f32 %v667, %v784
  %v798 = vsub.f32 %v672, %v784
  %v799 = vsub.f32 %v675, %v784
  %v800 = vsub.f32 %v680, %v784
  %v801 = vsub.f32 %v683, %v784
  %v802 = vsub.f32 %v688, %v784
  %v803 = vsub.f32 %v691, %v784
  %v804 = vadd.f32 %v787, 1e-05
  %v805 = vrsqrt.pop %v804
  %v806 = vmul.f32 %v788, %v805
  %v807 = vmul.f32 %v789, %v805
  %v808 = vmul.f32 %v790, %v805
  %v809 = vmul.f32 %v791, %v805
  %v810 = vmul.f32 %v792, %v805
  %v811 = vmul.f32 %v793, %v805
  %v812 = vmul.f32 %v794, %v805
  %v813 = vmul.f32 %v795, %v805
  %v814 = vmul.f32 %v796, %v805
  %v815 = vmul.f32 %v797, %v805
  %v816 = vmul.f32 %v798, %v805
  %v817 = vmul.f32 %v799, %v805
  %v818 = vmul.f32 %v800, %v805
  %v819 = vmul.f32 %v801, %v805
  %v820 = vmul.f32 %v802, %v805
  %v821 = vmul.f32 %v803, %v805
  %823 = vset.pattern.permute.xlu0 0
  %824 = vperm.xlu0 %823, %v694
  %v825 = vpop.permute.xlu0 %824
  %828 = vset.pattern.permute.xlu0 0
  %829 = vperm.xlu0 %828, %v695
  %v830 = vpop.permute.xlu0 %829
  %833 = vset.pattern.permute.xlu0 0
  %834 = vperm.xlu0 %833, %v696
  %v835 = vpop.permute.xlu0 %834
  %838 = vset.pattern.permute.xlu0 0
  %839 = vperm.xlu0 %838, %v697
  %v840 = vpop.permute.xlu0 %839
  %843 = vset.pattern.permute.xlu0 0
  %844 = vperm.xlu0 %843, %v698
  %v845 = vpop.permute.xlu0 %844
  %848 = vset.pattern.permute.xlu0 0
  %849 = vperm.xlu0 %848, %v699
  %v850 = vpop.permute.xlu0 %849
  %853 = vset.pattern.permute.xlu0 0
  %854 = vperm.xlu0 %853, %v700
  %v855 = vpop.permute.xlu0 %854
  %858 = vset.pattern.permute.xlu0 0
  %859 = vperm.xlu0 %858, %v701
  %v860 = vpop.permute.xlu0 %859
  %863 = vset.pattern.permute.xlu0 0
  %864 = vperm.xlu0 %863, %v702
  %v865 = vpop.permute.xlu0 %864
  %868 = vset.pattern.permute.xlu0 0
  %869 = vperm.xlu0 %868, %v703
  %v870 = vpop.permute.xlu0 %869
  %873 = vset.pattern.permute.xlu0 0
  %874 = vperm.xlu0 %873, %v704
  %v875 = vpop.permute.xlu0 %874
  %878 = vset.pattern.permute.xlu0 0
  %879 = vperm.xlu0 %878, %v705
  %v880 = vpop.permute.xlu0 %879
  %883 = vset.pattern.permute.xlu0 0
  %884 = vperm.xlu0 %883, %v706
  %v885 = vpop.permute.xlu0 %884
  %888 = vset.pattern.permute.xlu0 0
  %889 = vperm.xlu0 %888, %v707
  %v890 = vpop.permute.xlu0 %889
  %893 = vset.pattern.permute.xlu0 0
  %894 = vperm.xlu0 %893, %v708
  %v895 = vpop.permute.xlu0 %894
  %898 = vset.pattern.permute.xlu0 0
  %899 = vperm.xlu0 %898, %v709
  %v900 = vpop.permute.xlu0 %899
  %v902 = vmul.f32 %v806, %v825
  %v903 = vmul.f32 %v807, %v830
  %v904 = vmul.f32 %v808, %v835
  %v905 = vmul.f32 %v809, %v840
  %v906 = vmul.f32 %v810, %v845
  %v907 = vmul.f32 %v811, %v850
  %v908 = vmul.f32 %v812, %v855
  %v909 = vmul.f32 %v813, %v860
  %v910 = vmul.f32 %v814, %v865
  %v911 = vmul.f32 %v815, %v870
  %v912 = vmul.f32 %v816, %v875
  %v913 = vmul.f32 %v817, %v880
  %v914 = vmul.f32 %v818, %v885
  %v915 = vmul.f32 %v819, %v890
  %v916 = vmul.f32 %v820, %v895
  %v917 = vmul.f32 %v821, %v900
  %919 = vset.pattern.permute.xlu0 0
  %920 = vperm.xlu0 %919, %v710
  %v921 = vpop.permute.xlu0 %920
  %924 = vset.pattern.permute.xlu0 0
  %925 = vperm.xlu0 %924, %v711
  %v926 = vpop.permute.xlu0 %925
  %929 = vset.pattern.permute.xlu0 0
  %930 = vperm.xlu0 %929, %v712
  %v931 = vpop.permute.xlu0 %930
  %934 = vset.pattern.permute.xlu0 0
  %935 = vperm.xlu0 %934, %v713
  %v936 = vpop.permute.xlu0 %935
  %939 = vset.pattern.permute.xlu0 0
  %940 = vperm.xlu0 %939, %v714
  %v941 = vpop.permute.xlu0 %940
  %944 = vset.pattern.permute.xlu0 0
  %945 = vperm.xlu0 %944, %v715
  %v946 = vpop.permute.xlu0 %945
  %949 = vset.pattern.permute.xlu0 0
  %950 = vperm.xlu0 %949, %v716
  %v951 = vpop.permute.xlu0 %950
  %954 = vset.pattern.permute.xlu0 0
  %955 = vperm.xlu0 %954, %v717
  %v956 = vpop.permute.xlu0 %955
  %959 = vset.pattern.permute.xlu0 0
  %960 = vperm.xlu0 %959, %v718
  %v961 = vpop.permute.xlu0 %960
  %964 = vset.pattern.permute.xlu0 0
  %965 = vperm.xlu0 %964, %v719
  %v966 = vpop.permute.xlu0 %965
  %969 = vset.pattern.permute.xlu0 0
  %970 = vperm.xlu0 %969, %v720
  %v971 = vpop.permute.xlu0 %970
  %974 = vset.pattern.permute.xlu0 0
  %975 = vperm.xlu0 %974, %v721
  %v976 = vpop.permute.xlu0 %975
  %979 = vset.pattern.permute.xlu0 0
  %980 = vperm.xlu0 %979, %v722
  %v981 = vpop.permute.xlu0 %980
  %984 = vset.pattern.permute.xlu0 0
  %985 = vperm.xlu0 %984, %v723
  %v986 = vpop.permute.xlu0 %985
  %989 = vset.pattern.permute.xlu0 0
  %990 = vperm.xlu0 %989, %v724
  %v991 = vpop.permute.xlu0 %990
  %994 = vset.pattern.permute.xlu0 0
  %995 = vperm.xlu0 %994, %v725
  %v996 = vpop.permute.xlu0 %995
  %v998 = vadd.f32 %v902, %v921
  %v999 = vadd.f32 %v903, %v926
  %v1000 = vadd.f32 %v904, %v931
  %v1001 = vadd.f32 %v905, %v936
  %v1002 = vadd.f32 %v906, %v941
  %v1003 = vadd.f32 %v907, %v946
  %v1004 = vadd.f32 %v908, %v951
  %v1005 = vadd.f32 %v909, %v956
  %v1006 = vadd.f32 %v910, %v961
  %v1007 = vadd.f32 %v911, %v966
  %v1008 = vadd.f32 %v912, %v971
  %v1009 = vadd.f32 %v913, %v976
  %v1010 = vadd.f32 %v914, %v981
  %v1011 = vadd.f32 %v915, %v986
  %v1012 = vadd.f32 %v916, %v991
  %v1013 = vadd.f32 %v917, %v996
  %v1014 = vmax.f32 %v998, 0.0
  %v1015 = vmax.f32 %v999, 0.0
  %v1016 = vmax.f32 %v1000, 0.0
  %v1017 = vmax.f32 %v1001, 0.0
  %v1018 = vmax.f32 %v1002, 0.0
  %v1019 = vmax.f32 %v1003, 0.0
  %v1020 = vmax.f32 %v1004, 0.0
  %v1021 = vmax.f32 %v1005, 0.0
  %v1022 = vmax.f32 %v1006, 0.0
  %v1023 = vmax.f32 %v1007, 0.0
  %v1024 = vmax.f32 %v1008, 0.0
  %v1025 = vmax.f32 %v1009, 0.0
  %v1026 = vmax.f32 %v1010, 0.0
  %v1027 = vmax.f32 %v1011, 0.0
  %v1028 = vmax.f32 %v1012, 0.0
  %v1029 = vmax.f32 %v1013, 0.0
  %v1030 = vld [vmem:[%s8] sm:$0xf]
  %v1031 = vld [vmem:[%s8 + $0x4] sm:$0xf]
  %v1032 = vld [vmem:[%s8 + $0x8] sm:$0xf]
  %v1033 = vld [vmem:[%s8 + $0xc] sm:$0xf]
  %v1034 = vld [vmem:[%s8 + $0x10] sm:$0xf]
  %v1035 = vld [vmem:[%s8 + $0x14] sm:$0xf]
  %v1036 = vld [vmem:[%s8 + $0x18] sm:$0xf]
  %v1037 = vld [vmem:[%s8 + $0x1c] sm:$0xf]
  %v1038 = vpack.c.bf16 %v1015, %v1014
  %v1039 = vpack.c.bf16 %v1017, %v1016
  %v1040 = vpack.c.bf16 %v1019, %v1018
  %v1041 = vpack.c.bf16 %v1021, %v1020
  %v1042 = vpack.c.bf16 %v1023, %v1022
  %v1043 = vpack.c.bf16 %v1025, %v1024
  %v1044 = vpack.c.bf16 %v1027, %v1026
  %v1045 = vpack.c.bf16 %v1029, %v1028
  %v1054 = vunpack.c.l.b16 %v1030
  %v1055 = vunpack.c.l.b16 %v1031
  %v1056 = vunpack.c.l.b16 %v1032
  %v1057 = vunpack.c.l.b16 %v1033
  %v1058 = vunpack.c.l.b16 %v1034
  %v1059 = vunpack.c.l.b16 %v1035
  %v1060 = vunpack.c.l.b16 %v1036
  %v1061 = vunpack.c.l.b16 %v1037
  %v1062 = vpack.c.b16 %v1055, %v1054
  %v1063 = vpack.c.b16 %v1057, %v1056
  %v1064 = vpack.c.b16 %v1059, %v1058
  %v1065 = vpack.c.b16 %v1061, %v1060
  %1070 = vmatprep.subr.bf16.mxu0 0
  %1071 = vmatpush1.bf16.msra.mxu0 %v1038
  %1072 = vmatprep.subr.bf16.mxu0 0
  %1073 = vmatpush1.bf16.msra.mxu0 %v1039
  %1074 = vmatprep.subr.bf16.mxu0 0
  %1075 = vmatpush1.bf16.msra.mxu0 %v1040
  %1076 = vmatprep.subr.bf16.mxu0 0
  %1077 = vmatpush1.bf16.msra.mxu0 %v1041
  %1078 = vmatprep.subr.bf16.mxu0 0
  %1079 = vmatpush1.bf16.msra.mxu0 %v1042
  %1080 = vmatprep.subr.bf16.mxu0 0
  %1081 = vmatpush1.bf16.msra.mxu0 %v1043
  %1082 = vmatprep.subr.bf16.mxu0 0
  %1083 = vmatpush1.bf16.msra.mxu0 %v1044
  %1084 = vmatprep.subr.bf16.mxu0 0
  %1085 = vmatpush1.bf16.msra.mxu0 %v1045
  %1086 = vmatprep.subr.bf16.mxu0 0
  %1087 = vmatpush1.bf16.msra.mxu0 0
  %1088 = vmatprep.subr.bf16.mxu0 0
  %1089 = vmatpush1.bf16.msra.mxu0 0
  %1090 = vmatprep.subr.bf16.mxu0 0
  %1091 = vmatpush1.bf16.msra.mxu0 0
  %1092 = vmatprep.subr.bf16.mxu0 0
  %1093 = vmatpush1.bf16.msra.mxu0 0
  %1094 = vmatprep.subr.bf16.mxu0 0
  %1095 = vmatpush1.bf16.msra.mxu0 0
  %1096 = vmatprep.subr.bf16.mxu0 0
  %1097 = vmatpush1.bf16.msra.mxu0 0
  %1098 = vmatprep.subr.bf16.mxu0 0
  %1099 = vmatpush1.bf16.msra.mxu0 0
  %1100 = vmatprep.subr.bf16.mxu0 0
  %1101 = vmatpush1.bf16.msra.mxu0 0
  %1102 = vmatprep.mubr.bf16.mxu0 0
  %1103 = vmatmul.mubr.bf16.gmra.mrb[0].mxu0 %v1062
  %v1104 = vpop.f32.mrb[0].mxu0
  %v1105 = vadd.f32 %v306, %v1104
  %v1106 = vpop.f32.mrb[0].mxu0
  %v1107 = vpop.f32.mrb[0].mxu0
  %v1108 = vadd.f32 %v309, %v1107
  %v1109 = vpop.f32.mrb[0].mxu0
  %1110 = vmatprep.mubr.bf16.mxu0 0
  %1111 = vmatmul.mubr.bf16.gmra.mrb[0].mxu0 %v1063
  %v1112 = vpop.f32.mrb[0].mxu0
  %v1113 = vadd.f32 %v314, %v1112
  %v1114 = vpop.f32.mrb[0].mxu0
  %v1115 = vpop.f32.mrb[0].mxu0
  %v1116 = vadd.f32 %v317, %v1115
  %v1117 = vpop.f32.mrb[0].mxu0
  %1118 = vmatprep.mubr.bf16.mxu0 0
  %1119 = vmatmul.mubr.bf16.gmra.mrb[0].mxu0 %v1064
  %v1120 = vpop.f32.mrb[0].mxu0
  %v1121 = vadd.f32 %v322, %v1120
  %v1122 = vpop.f32.mrb[0].mxu0
  %v1123 = vpop.f32.mrb[0].mxu0
  %v1124 = vadd.f32 %v325, %v1123
  %v1125 = vpop.f32.mrb[0].mxu0
  %1126 = vmatprep.mubr.bf16.mxu0 0
  %1127 = vmatmul.mubr.bf16.gmra.mrb[0].mxu0 %v1065
  %v1128 = vpop.f32.mrb[0].mxu0
  %v1129 = vadd.f32 %v330, %v1128
  %v1130 = vpop.f32.mrb[0].mxu0
  %v1131 = vpop.f32.mrb[0].mxu0
  %v1132 = vadd.f32 %v333, %v1131
  %v1133 = vpop.f32.mrb[0].mxu0
  %1134 = vdwg.mxu0
  %v1135 = vld [vmem:[%s9] sm:$0xff]
  %v1136 = vld [vmem:[%s9 + $0x8] sm:$0xff]
  %v1137 = vld [vmem:[%s9 + $0x10] sm:$0xff]
  %v1138 = vld [vmem:[%s9 + $0x18] sm:$0xff]
  %v1139 = vld [vmem:[%s9 + $0x20] sm:$0xff]
  %v1140 = vld [vmem:[%s9 + $0x28] sm:$0xff]
  %v1141 = vld [vmem:[%s9 + $0x30] sm:$0xff]
  %v1142 = vld [vmem:[%s9 + $0x38] sm:$0xff]
  %v1143 = vld [vmem:[%s10] sm:$0xff]
  %v1144 = vld [vmem:[%s10 + $0x8] sm:$0xff]
  %v1145 = vld [vmem:[%s10 + $0x10] sm:$0xff]
  %v1146 = vld [vmem:[%s10 + $0x18] sm:$0xff]
  %v1147 = vld [vmem:[%s10 + $0x20] sm:$0xff]
  %v1148 = vld [vmem:[%s10 + $0x28] sm:$0xff]
  %v1149 = vld [vmem:[%s10 + $0x30] sm:$0xff]
  %v1150 = vld [vmem:[%s10 + $0x38] sm:$0xff]
  %v1151 = vadd.f32 %v1105, %v1108
  %v1152 = vadd.f32 %v1151, %v1113
  %v1153 = vadd.f32 %v1152, %v1116
  %v1154 = vadd.f32 %v1153, %v1121
  %v1155 = vadd.f32 %v1154, %v1124
  %v1156 = vadd.f32 %v1155, %v1129
  %v1157 = vadd.f32 %v1156, %v1132
  %v1158 = vrot.slane %v1157, 4
  %v1159 = vadd.f32 %v1157, %v1158
  %v1160 = vrot.slane %v1159, 2
  %v1161 = vadd.f32 %v1159, %v1160
  %v1162 = vrot.slane %v1161, 1
  %v1163 = vadd.f32 %v1161, %v1162
  %v1164 = vmul.f32 %v1105, %v1105
  %v1165 = vmul.f32 %v1108, %v1108
  %v1166 = vmul.f32 %v1113, %v1113
  %v1167 = vmul.f32 %v1116, %v1116
  %v1168 = vmul.f32 %v1121, %v1121
  %v1169 = vmul.f32 %v1124, %v1124
  %v1170 = vmul.f32 %v1129, %v1129
  %v1171 = vmul.f32 %v1132, %v1132
  %v1172 = vadd.f32 %v1164, %v1165
  %v1173 = vadd.f32 %v1172, %v1166
  %v1174 = vadd.f32 %v1173, %v1167
  %v1175 = vadd.f32 %v1174, %v1168
  %v1176 = vadd.f32 %v1175, %v1169
  %v1177 = vadd.f32 %v1176, %v1170
  %v1178 = vadd.f32 %v1177, %v1171
  %v1179 = vrot.slane %v1178, 4
  %v1180 = vadd.f32 %v1178, %v1179
  %v1181 = vrot.slane %v1180, 2
  %v1182 = vadd.f32 %v1180, %v1181
  %v1183 = vrot.slane %v1182, 1
  %v1184 = vadd.f32 %v1182, %v1183
  %v1185 = vmul.f32 %v1163, 0.015625
  %v1186 = vmul.f32 %v1184, 0.015625
  %v1187 = vmul.f32 %v1185, %v1185
  %v1188 = vsub.f32 %v1186, %v1187
  %v1189 = vsub.f32 %v1105, %v1185
  %v1190 = vsub.f32 %v1108, %v1185
  %v1191 = vsub.f32 %v1113, %v1185
  %v1192 = vsub.f32 %v1116, %v1185
  %v1193 = vsub.f32 %v1121, %v1185
  %v1194 = vsub.f32 %v1124, %v1185
  %v1195 = vsub.f32 %v1129, %v1185
  %v1196 = vsub.f32 %v1132, %v1185
  %v1197 = vadd.f32 %v1188, 1e-05
  %v1198 = vrsqrt.pop %v1197
  %v1199 = vmul.f32 %v1189, %v1198
  %v1200 = vmul.f32 %v1190, %v1198
  %v1201 = vmul.f32 %v1191, %v1198
  %v1202 = vmul.f32 %v1192, %v1198
  %v1203 = vmul.f32 %v1193, %v1198
  %v1204 = vmul.f32 %v1194, %v1198
  %v1205 = vmul.f32 %v1195, %v1198
  %v1206 = vmul.f32 %v1196, %v1198
  %1208 = vset.pattern.permute.xlu0 0
  %1209 = vperm.xlu0 %1208, %v1135
  %v1210 = vpop.permute.xlu0 %1209
  %1213 = vset.pattern.permute.xlu0 0
  %1214 = vperm.xlu0 %1213, %v1136
  %v1215 = vpop.permute.xlu0 %1214
  %1218 = vset.pattern.permute.xlu0 0
  %1219 = vperm.xlu0 %1218, %v1137
  %v1220 = vpop.permute.xlu0 %1219
  %1223 = vset.pattern.permute.xlu0 0
  %1224 = vperm.xlu0 %1223, %v1138
  %v1225 = vpop.permute.xlu0 %1224
  %1228 = vset.pattern.permute.xlu0 0
  %1229 = vperm.xlu0 %1228, %v1139
  %v1230 = vpop.permute.xlu0 %1229
  %1233 = vset.pattern.permute.xlu0 0
  %1234 = vperm.xlu0 %1233, %v1140
  %v1235 = vpop.permute.xlu0 %1234
  %1238 = vset.pattern.permute.xlu0 0
  %1239 = vperm.xlu0 %1238, %v1141
  %v1240 = vpop.permute.xlu0 %1239
  %1243 = vset.pattern.permute.xlu0 0
  %1244 = vperm.xlu0 %1243, %v1142
  %v1245 = vpop.permute.xlu0 %1244
  %v1247 = vmul.f32 %v1199, %v1210
  %v1248 = vmul.f32 %v1200, %v1215
  %v1249 = vmul.f32 %v1201, %v1220
  %v1250 = vmul.f32 %v1202, %v1225
  %v1251 = vmul.f32 %v1203, %v1230
  %v1252 = vmul.f32 %v1204, %v1235
  %v1253 = vmul.f32 %v1205, %v1240
  %v1254 = vmul.f32 %v1206, %v1245
  %1256 = vset.pattern.permute.xlu0 0
  %1257 = vperm.xlu0 %1256, %v1143
  %v1258 = vpop.permute.xlu0 %1257
  %1261 = vset.pattern.permute.xlu0 0
  %1262 = vperm.xlu0 %1261, %v1144
  %v1263 = vpop.permute.xlu0 %1262
  %1266 = vset.pattern.permute.xlu0 0
  %1267 = vperm.xlu0 %1266, %v1145
  %v1268 = vpop.permute.xlu0 %1267
  %1271 = vset.pattern.permute.xlu0 0
  %1272 = vperm.xlu0 %1271, %v1146
  %v1273 = vpop.permute.xlu0 %1272
  %1276 = vset.pattern.permute.xlu0 0
  %1277 = vperm.xlu0 %1276, %v1147
  %v1278 = vpop.permute.xlu0 %1277
  %1281 = vset.pattern.permute.xlu0 0
  %1282 = vperm.xlu0 %1281, %v1148
  %v1283 = vpop.permute.xlu0 %1282
  %1286 = vset.pattern.permute.xlu0 0
  %1287 = vperm.xlu0 %1286, %v1149
  %v1288 = vpop.permute.xlu0 %1287
  %1291 = vset.pattern.permute.xlu0 0
  %1292 = vperm.xlu0 %1291, %v1150
  %v1293 = vpop.permute.xlu0 %1292
  %v1295 = vadd.f32 %v1247, %v1258
  %v1296 = vadd.f32 %v1248, %v1263
  %v1297 = vadd.f32 %v1249, %v1268
  %v1298 = vadd.f32 %v1250, %v1273
  %v1299 = vadd.f32 %v1251, %v1278
  %v1300 = vadd.f32 %v1252, %v1283
  %v1301 = vadd.f32 %v1253, %v1288
  %v1302 = vadd.f32 %v1254, %v1293
  %v1303 = vmax.f32 %v1295, 0.0
  %v1304 = vmax.f32 %v1296, 0.0
  %v1305 = vmax.f32 %v1297, 0.0
  %v1306 = vmax.f32 %v1298, 0.0
  %v1307 = vmax.f32 %v1299, 0.0
  %v1308 = vmax.f32 %v1300, 0.0
  %v1309 = vmax.f32 %v1301, 0.0
  %v1310 = vmax.f32 %v1302, 0.0
  %v1311 = vld [vmem:[%s11] sm:$0xf]
  %v1312 = vld [vmem:[%s11 + $0x4] sm:$0xf]
  %v1313 = vpack.c.bf16 %v1304, %v1303
  %v1314 = vpack.c.bf16 %v1306, %v1305
  %v1315 = vpack.c.bf16 %v1308, %v1307
  %v1316 = vpack.c.bf16 %v1310, %v1309
  %v1319 = vunpack.c.l.b16 %v1311
  %v1320 = vunpack.c.l.b16 %v1312
  %v1321 = vpack.c.b16 %v1320, %v1319
  %v1323 = vsel %vm572, %v1321, 0
  %1325 = vmatprep.subr.bf16.mxu0 0
  %1326 = vmatpush1.bf16.msra.mxu0 %v1313
  %1327 = vmatprep.subr.bf16.mxu0 0
  %1328 = vmatpush1.bf16.msra.mxu0 %v1314
  %1329 = vmatprep.subr.bf16.mxu0 0
  %1330 = vmatpush1.bf16.msra.mxu0 %v1315
  %1331 = vmatprep.subr.bf16.mxu0 0
  %1332 = vmatpush1.bf16.msra.mxu0 %v1316
  %1333 = vmatprep.subr.bf16.mxu0 0
  %1334 = vmatpush1.bf16.msra.mxu0 0
  %1335 = vmatprep.subr.bf16.mxu0 0
  %1336 = vmatpush1.bf16.msra.mxu0 0
  %1337 = vmatprep.subr.bf16.mxu0 0
  %1338 = vmatpush1.bf16.msra.mxu0 0
  %1339 = vmatprep.subr.bf16.mxu0 0
  %1340 = vmatpush1.bf16.msra.mxu0 0
  %1341 = vmatprep.subr.bf16.mxu0 0
  %1342 = vmatpush1.bf16.msra.mxu0 0
  %1343 = vmatprep.subr.bf16.mxu0 0
  %1344 = vmatpush1.bf16.msra.mxu0 0
  %1345 = vmatprep.subr.bf16.mxu0 0
  %1346 = vmatpush1.bf16.msra.mxu0 0
  %1347 = vmatprep.subr.bf16.mxu0 0
  %1348 = vmatpush1.bf16.msra.mxu0 0
  %1349 = vmatprep.subr.bf16.mxu0 0
  %1350 = vmatpush1.bf16.msra.mxu0 0
  %1351 = vmatprep.subr.bf16.mxu0 0
  %1352 = vmatpush1.bf16.msra.mxu0 0
  %1353 = vmatprep.subr.bf16.mxu0 0
  %1354 = vmatpush1.bf16.msra.mxu0 0
  %1355 = vmatprep.subr.bf16.mxu0 0
  %1356 = vmatpush1.bf16.msra.mxu0 0
  %1357 = vmatprep.mubr.bf16.mxu0 0
  %1358 = vmatmul.mubr.bf16.gmra.mrb[0].mxu0 %v1323
  %v1359 = vpop.f32.mrb[0].mxu0
  %v1360 = vadd.f32 0.0, %v1359
  %v1361 = vpop.f32.mrb[0].mxu0
  %v1362 = vpop.f32.mrb[0].mxu0
  %v1363 = vadd.f32 0.0, %v1362
  %v1364 = vpop.f32.mrb[0].mxu0
  %1365 = vdwg.mxu0
  %v1366 = vld [vmem:[%s12] sm:$0xff]
  %v1367 = vld [vmem:[%s12 + $0x8] sm:$0xff]
  %v1368 = vld [vmem:[%s13] sm:$0xff]
  %v1369 = vld [vmem:[%s13 + $0x8] sm:$0xff]
  %v1370 = vadd.f32 %v1360, %v1363
  %v1371 = vrot.slane %v1370, 4
  %v1372 = vadd.f32 %v1370, %v1371
  %v1373 = vrot.slane %v1372, 2
  %v1374 = vadd.f32 %v1372, %v1373
  %v1375 = vrot.slane %v1374, 1
  %v1376 = vadd.f32 %v1374, %v1375
  %v1377 = vmul.f32 %v1360, %v1360
  %v1378 = vmul.f32 %v1363, %v1363
  %v1379 = vadd.f32 %v1377, %v1378
  %v1380 = vrot.slane %v1379, 4
  %v1381 = vadd.f32 %v1379, %v1380
  %v1382 = vrot.slane %v1381, 2
  %v1383 = vadd.f32 %v1381, %v1382
  %v1384 = vrot.slane %v1383, 1
  %v1385 = vadd.f32 %v1383, %v1384
  %v1386 = vmul.f32 %v1376, 0.0625
  %v1387 = vmul.f32 %v1385, 0.0625
  %v1388 = vmul.f32 %v1386, %v1386
  %v1389 = vsub.f32 %v1387, %v1388
  %v1390 = vsub.f32 %v1360, %v1386
  %v1391 = vsub.f32 %v1363, %v1386
  %v1392 = vadd.f32 %v1389, 1e-05
  %v1393 = vrsqrt.pop %v1392
  %v1394 = vmul.f32 %v1390, %v1393
  %v1395 = vmul.f32 %v1391, %v1393
  %1397 = vset.pattern.permute.xlu0 0
  %1398 = vperm.xlu0 %1397, %v1366
  %v1399 = vpop.permute.xlu0 %1398
  %1402 = vset.pattern.permute.xlu0 0
  %1403 = vperm.xlu0 %1402, %v1367
  %v1404 = vpop.permute.xlu0 %1403
  %v1406 = vmul.f32 %v1394, %v1399
  %v1407 = vmul.f32 %v1395, %v1404
  %1409 = vset.pattern.permute.xlu0 0
  %1410 = vperm.xlu0 %1409, %v1368
  %v1411 = vpop.permute.xlu0 %1410
  %1414 = vset.pattern.permute.xlu0 0
  %1415 = vperm.xlu0 %1414, %v1369
  %v1416 = vpop.permute.xlu0 %1415
  %v1418 = vadd.f32 %v1406, %v1411
  %v1419 = vadd.f32 %v1407, %v1416
  %v1420 = vmax.f32 %v1418, 0.0
  %v1421 = vmax.f32 %v1419, 0.0
  %v1422 = vld [vmem:[%s14] sm:$0xff]
  %v1423 = vld [vmem:[%s14 + $0x8] sm:$0xff]
  %1425 = vset.pattern.permute.xlu0 0
  %1426 = vperm.xlu0 %1425, %v1422
  %v1427 = vpop.permute.xlu0 %1426
  %1430 = vset.pattern.permute.xlu0 0
  %1431 = vperm.xlu0 %1430, %v1423
  %v1432 = vpop.permute.xlu0 %1431
  %v1434 = vmul.f32 %v1420, %v1427
  %v1435 = vmul.f32 %v1421, %v1432
  %v1436 = vadd.f32 %v1434, %v1435
  %v1437 = vrot.slane %v1436, 4
  %v1438 = vadd.f32 %v1436, %v1437
  %v1439 = vrot.slane %v1438, 2
  %v1440 = vadd.f32 %v1438, %v1439
  %v1441 = vrot.slane %v1440, 1
  %v1442 = vadd.f32 %v1440, %v1441
  %v1443 = vld [vmem:[#allocation2] sm:$0x1]
  %1445 = vset.pattern.permute.xlu0 0
  %1446 = vperm.xlu0 %1445, %v1443
  %v1447 = vpop.permute.xlu0 %1446
  %v1449 = vlaneseq
  %v1450 = vshrl.u32 %v1449, 7
  %v1451 = vsub.s32 0, %v1450
  %v1452 = vrot.slane %v1447, %v1451
  %v1453 = vadd.f32 %v1442, %v1452
  %v1454 = vxor.u32 %v1453, 2147483648
  %v1455 = vmul.f32 %v1454, 1.442695
  %v1456 = vpow.pop %v1455
  %v1457 = vadd.f32 %v1456, 1.0
  %v1458 = vrcp.pop %v1457
  %v1459 = vmul.f32 1.0, %v1458
  %1460 = vst [vmem:[%s16] sm:$0x1] %v1459
  // Predicated region
  $region66: #{scope_net_forward.1} parent=0 // pred_check
    _
  $region67: #{scope_net_forward.1} parent=0 // pred_check_branch
    %1462 = sbr.rel (0) target = $region69
  $region68: #{scope_net_forward.1} parent=0 // pred_region
    _
  $region69: #{scope_net_forward.1} parent=0 // pred_fallthru
    _
  // Predicated region
  $region70: #{scope_net_forward.1} parent=0 // pred_check
    _
  $region71: #{scope_net_forward.1} parent=0 // pred_check_branch
    %1464 = sbr.rel (0) target = $region73
  $region72: #{scope_net_forward.1} parent=0 // pred_region
    _
  $region73: #{scope_net_forward.1} parent=0 // pred_fallthru
    _

</llo_original>
